<compile_context>
chip_gen: v6e
topology: v6e:2x2x1
jax: 0.10.0
libtpu: 0.0.40
codegen_flags: <defaults>
</compile_context>

<pallas_src>
import math

import jax
import jax.numpy as jnp
from jax.experimental import pallas as pl
from jax.experimental.pallas import tpu as pltpu


def _vmem_limit_bytes():
    """Generation-aware scoped-VMEM limit (v5e/v6e 128 MiB, v7x 64 MiB/TC)."""
    cap = 128 * 1024 * 1024
    try:
        cap = int(getattr(pltpu.get_tpu_info(), "vmem_capacity_bytes", cap))
    except Exception:
        pass
    return min((cap * 3) // 4, 96 * 1024 * 1024)


def _choose_tile(dim, preferred, multiple):
    """Largest tile <= preferred that is a multiple of `multiple` and divides
    `dim` exactly; falls back to the full dim (always a legal block)."""
    if dim <= preferred:
        return dim
    t = (preferred // multiple) * multiple
    while t >= multiple:
        if dim % t == 0:
            return t
        t -= multiple
    return dim


# ----------------------------------------------------------------------------
# Kernel 1: fused Q/K/V projection (bf16 MXU operands, f32 accumulation)
#   inputs : xq, xk, xv (N, D) bf16; w3 (3, H, D, d_k) bf16; b3 (3, H, 1, d_k) f32
#   output : qkv (3, H, N, d_k) bf16   -- head-major, contiguous per-head blocks
# ----------------------------------------------------------------------------
def _qkv_proj_kernel(xq_ref, xk_ref, xv_ref, w_ref, b_ref, o_ref, acc_ref):
    ks = pl.program_id(2)

    @pl.when(ks == 0)
    def _():
        acc_ref[...] = jnp.zeros_like(acc_ref)

    acc_ref[0, 0] += jnp.dot(xq_ref[...], w_ref[0, 0],
                             preferred_element_type=jnp.float32)
    acc_ref[1, 0] += jnp.dot(xk_ref[...], w_ref[1, 0],
                             preferred_element_type=jnp.float32)
    acc_ref[2, 0] += jnp.dot(xv_ref[...], w_ref[2, 0],
                             preferred_element_type=jnp.float32)

    @pl.when(ks == pl.num_programs(2) - 1)
    def _():
        # bias added once on the last K step, in f32, then cast to bf16
        o_ref[...] = (acc_ref[...] + b_ref[...]).astype(o_ref.dtype)


def qkv_projection(xq, xk, xv, w3, b3):
    N, Din = xq.shape
    _, H, _, dk = w3.shape
    TM = _choose_tile(N, 512, 16)      # bigger row tile -> less weight re-streaming
    TK = _choose_tile(Din, 512, 128)
    grid = (N // TM, H, Din // TK)

    x_spec = pl.BlockSpec((TM, TK), lambda i, j, ks: (i, ks))
    flops = 2 * 3 * N * Din * H * dk
    bytes_acc = 2 * (3 * N * Din + 3 * Din * H * dk + 3 * N * H * dk)

    return pl.pallas_call(
        _qkv_proj_kernel,
        out_shape=jax.ShapeDtypeStruct((3, H, N, dk), jnp.bfloat16),
        grid=grid,
        in_specs=[
            x_spec, x_spec, x_spec,
            pl.BlockSpec((3, 1, TK, dk), lambda i, j, ks: (0, j, ks, 0)),
            pl.BlockSpec((3, 1, 1, dk), lambda i, j, ks: (0, j, 0, 0)),
        ],
        out_specs=pl.BlockSpec((3, 1, TM, dk), lambda i, j, ks: (0, j, i, 0)),
        scratch_shapes=[pltpu.VMEM((3, 1, TM, dk), jnp.float32)],
        compiler_params=pltpu.CompilerParams(
            dimension_semantics=("parallel", "parallel", "arbitrary"),
            vmem_limit_bytes=_vmem_limit_bytes()),
        cost_estimate=pl.CostEstimate(flops=flops, transcendentals=0,
                                      bytes_accessed=bytes_acc),
    )(xq, xk, xv, w3, b3)


# ----------------------------------------------------------------------------
# Kernel 2: flash attention + fused output projection
#   grid = (B, Sq tiles, Skv tiles); KV axis last / "arbitrary"
#   all H heads batched per step; W_o applied in the finalize (K = d_model)
# ----------------------------------------------------------------------------
def _attention_kernel(tflag_ref, q_ref, k_ref, v_ref, bias_ref, wo_ref, bo_ref,
                      o_ref, m_sc, l_sc, acc_sc, ctx_sc):
    b = pl.program_id(0)
    qi = pl.program_id(1)
    ki = pl.program_id(2)

    @pl.when(ki == 0)
    def _():
        m_sc[...] = jnp.full_like(m_sc, -jnp.inf)
        l_sc[...] = jnp.zeros_like(l_sc)
        acc_sc[...] = jnp.zeros_like(acc_sc)

    # Skip fully-masked KV tiles (flag scalar-prefetched into SMEM).
    row = b * pl.num_programs(1) + qi

    @pl.when(tflag_ref[row, ki] > 0)
    def _():
        q = q_ref[...]                               # (H, TQ, dk) bf16, pre-scaled
        k = k_ref[...]                               # (H, TKV, dk) bf16
        v = v_ref[...]                               # (H, TKV, dk) bf16
        bias = bias_ref[...].astype(jnp.float32)     # (TQ, TKV) additive mask bias

        s = jnp.einsum("hqd,hkd->hqk", q, k,
                       preferred_element_type=jnp.float32)
        s = s + bias[None, :, :]

        m_prev = m_sc[...]
        m_new = jnp.maximum(m_prev, jnp.max(s, axis=-1, keepdims=True))
        alpha = jnp.exp(m_prev - m_new)
        p = jnp.exp(s - m_new)
        l_sc[...] = alpha * l_sc[...] + jnp.sum(p, axis=-1, keepdims=True)
        acc_sc[...] = alpha * acc_sc[...] + jnp.einsum(
            "hqk,hkd->hqd", p.astype(jnp.bfloat16), v,
            preferred_element_type=jnp.float32)
        m_sc[...] = m_new

    @pl.when(ki == pl.num_programs(2) - 1)
    def _():
        nh, _, dkk = acc_sc.shape
        l = l_sc[...]
        l = jnp.where(l > 0.0, l, 1.0)               # guard fully-masked q rows
        inv_l = pl.reciprocal(l, approx=True)        # EUP slot, ~free
        # stage concat-of-heads (torch layout: head-major columns) in VMEM
        for h in range(nh):
            ctx_sc[:, h * dkk:(h + 1) * dkk] = (
                acc_sc[h] * inv_l[h]).astype(ctx_sc.dtype)
        # fused W_o: one (TQ, D) x (D, D) matmul, full K depth, lane-dense store
        out = jnp.dot(ctx_sc[...], wo_ref[...],
                      preferred_element_type=jnp.float32) + bo_ref[...]
        o_ref[...] = out.astype(o_ref.dtype)


def attention(qkv, mask, wo, bo, *, batch, seq):
    _, H, N, dk = qkv.shape
    D = H * dk
    TQ = _choose_tile(seq, 128, 16)
    TKV = _choose_tile(seq, 512, 128)
    nq = seq // TQ
    nk = seq // TKV

    # (3, H, B*S, dk) -> (3, H, B, S, dk): splits a major dim, no data movement
    qkv5 = qkv.reshape(3, H, batch, seq, dk)

    # Additive bf16 mask bias (half the mask bytes, no per-element cmp+select).
    bias = jnp.where(mask == 0, jnp.float32(-1e9),
                     jnp.float32(0.0)).astype(jnp.bfloat16)        # (B,1,S,S)

    # Per-(batch, q-tile, kv-tile) activity flags for tile skipping.
    tile_active = (mask.reshape(batch, nq, TQ, nk, TKV) != 0)
    tile_active = tile_active.any(axis=(2, 4)).astype(jnp.int32)
    tile_active = tile_active.reshape(batch * nq, nk)

    flops = 4 * batch * H * seq * seq * dk + 2 * batch * seq * D * D
    bytes_acc = 2 * (3 * H * N * dk + batch * seq * seq + D * D) + 4 * N * D

    grid_spec = pltpu.PrefetchScalarGridSpec(
        num_scalar_prefetch=1,
        grid=(batch, nq, nk),
        in_specs=[
            pl.BlockSpec((None, H, None, TQ, dk),
                         lambda b, qi, ki, tf: (0, 0, b, qi, 0)),
            pl.BlockSpec((None, H, None, TKV, dk),
                         lambda b, qi, ki, tf: (1, 0, b, ki, 0)),
            pl.BlockSpec((None, H, None, TKV, dk),
                         lambda b, qi, ki, tf: (2, 0, b, ki, 0)),
            pl.BlockSpec((None, None, TQ, TKV),
                         lambda b, qi, ki, tf: (b, 0, qi, ki)),
            pl.BlockSpec((D, D), lambda b, qi, ki, tf: (0, 0)),   # W_o, resident
            pl.BlockSpec((1, D), lambda b, qi, ki, tf: (0, 0)),   # b_o, resident
        ],
        out_specs=pl.BlockSpec((None, TQ, D), lambda b, qi, ki, tf: (b, qi, 0)),
        scratch_shapes=[
            pltpu.VMEM((H, TQ, 1), jnp.float32),    # running max
            pltpu.VMEM((H, TQ, 1), jnp.float32),    # running denominator
            pltpu.VMEM((H, TQ, dk), jnp.float32),   # per-head output accumulator
            pltpu.VMEM((TQ, D), jnp.bfloat16),      # concat-heads staging for W_o
        ],
    )

    return pl.pallas_call(
        _attention_kernel,
        out_shape=jax.ShapeDtypeStruct((batch, seq, D), jnp.float32),
        grid_spec=grid_spec,
        compiler_params=pltpu.CompilerParams(
            dimension_semantics=("parallel", "parallel", "arbitrary"),
            vmem_limit_bytes=_vmem_limit_bytes()),
        cost_estimate=pl.CostEstimate(
            flops=flops, transcendentals=batch * H * seq * seq,
            bytes_accessed=bytes_acc),
    )(tile_active, qkv5, qkv5, qkv5, bias, wo, bo)


# ----------------------------------------------------------------------------
# Full module forward (head count comes from static weight shapes -> jit-safe)
# ----------------------------------------------------------------------------
def mha_forward(params, q, k, v, mask):
    B, S, D = q.shape
    N = B * S
    H = params["w_qkv"].shape[1]          # static python ints at trace time
    dk = params["w_qkv"].shape[-1]
    assert H * dk == D

    xq = q.reshape(N, D).astype(jnp.bfloat16)
    xk = k.reshape(N, D).astype(jnp.bfloat16)
    xv = v.reshape(N, D).astype(jnp.bfloat16)

    qkv = qkv_projection(xq, xk, xv, params["w_qkv"], params["b_qkv"])
    out = attention(qkv, mask, params["wo"], params["bo"], batch=B, seq=S)
    return out                                              # (B, S, D) f32


# ----------------------------------------------------------------------------
# Parameter init (nn.Linear-style) + head-major bf16 packing for the kernels
# ----------------------------------------------------------------------------
def init_logical_params(key, d_model):
    bound = 1.0 / math.sqrt(d_model)
    keys = jax.random.split(key, 8)

    def u(kk, shape):
        return jax.random.uniform(kk, shape, jnp.float32, -bound, bound)

    return {
        "wq": u(keys[0], (d_model, d_model)), "bq": u(keys[1], (1, d_model)),
        "wk": u(keys[2], (d_model, d_model)), "bk": u(keys[3], (1, d_model)),
        "wv": u(keys[4], (d_model, d_model)), "bv": u(keys[5], (1, d_model)),
        "wo": u(keys[6], (d_model, d_model)), "bo": u(keys[7], (1, d_model)),
    }


def pack_params(p, num_heads):
    D = p["wq"].shape[0]
    dk = D // num_heads
    scale = 1.0 / math.sqrt(dk)           # folded into W_q / b_q (review item)

    def split_w(w):   # (D, D) -> (H, D, dk)
        return w.reshape(D, num_heads, dk).transpose(1, 0, 2)

    def split_b(b):   # (1, D) -> (H, 1, dk)
        return b.reshape(num_heads, dk)[:, None, :]

    w_qkv = jnp.stack([split_w(p["wq"]) * scale,
                       split_w(p["wk"]),
                       split_w(p["wv"])])
    b_qkv = jnp.stack([split_b(p["bq"]) * scale,
                       split_b(p["bk"]),
                       split_b(p["bv"])])
    return {
        "w_qkv": w_qkv.astype(jnp.bfloat16),
        "b_qkv": b_qkv.astype(jnp.float32),
        "wo": p["wo"].astype(jnp.bfloat16),
        "bo": p["bo"].astype(jnp.float32),
    }


# ----------------------------------------------------------------------------
# Pure-JAX reference (mirrors the PyTorch module, eval mode)
# ----------------------------------------------------------------------------
def mha_reference(p, q, k, v, mask, *, num_heads):
    B, S, D = q.shape
    dk = D // num_heads

    qf = q @ p["wq"] + p["bq"]
    kf = k @ p["wk"] + p["bk"]
    vf = v @ p["wv"] + p["bv"]
    qh = qf.reshape(B, S, num_heads, dk).transpose(0, 2, 1, 3)
    kh = kf.reshape(B, S, num_heads, dk).transpose(0, 2, 1, 3)
    vh = vf.reshape(B, S, num_heads, dk).transpose(0, 2, 1, 3)
    scores = jnp.einsum("bhqd,bhkd->bhqk", qh, kh) / math.sqrt(dk)
    scores = jnp.where(mask == 0, -1e9, scores)
    probs = jax.nn.softmax(scores, axis=-1)
    x = jnp.einsum("bhqk,bhkd->bhqd", probs, vh)
    x = x.transpose(0, 2, 1, 3).reshape(B, S, D)
    return x @ p["wo"] + p["bo"]


if __name__ == "__main__":
    B, S, D, H = 2, 8, 32, 4      # batch, seq, d_model, heads (d_k = 8)

    root = jax.random.PRNGKey(0)
    kp, kq, kk, kv = jax.random.split(root, 4)

    logical = init_logical_params(kp, D)
    kparams = pack_params(logical, H)

    q = jax.random.normal(kq, (B, S, D), jnp.float32)
    k = jax.random.normal(kk, (B, S, D), jnp.float32)
    v = jax.random.normal(kv, (B, S, D), jnp.float32)
    # causal mask (B, 1, S, S): 1 = attend, 0 = masked
    mask = jnp.broadcast_to(jnp.tril(jnp.ones((S, S), jnp.float32))[None, None],
                            (B, 1, S, S))

    out = jax.block_until_ready(jax.jit(mha_forward)(kparams, q, k, v, mask))

    ref = mha_reference(logical, q, k, v, mask, num_heads=H)
    assert out.shape == (B, S, D)
    # tolerance leaves headroom for bf16 MXU operands + approx reciprocal
    max_err = float(jnp.max(jnp.abs(out - ref)))
    assert jnp.allclose(out, ref, atol=5e-2, rtol=5e-2), f"mismatch: {max_err}"

    print("KERNEL_OK")
</pallas_src>

<mosaic_0001>
module attributes {stable_mosaic.version = 11 : i64} {
  func.func @_qkv_proj_kernel(%arg0: i32, %arg1: i32, %arg2: i32, %arg3: memref<16x32xbf16, #tpu.memory_space<vmem>>, %arg4: memref<16x32xbf16, #tpu.memory_space<vmem>>, %arg5: memref<16x32xbf16, #tpu.memory_space<vmem>>, %arg6: memref<3x1x32x8xbf16, #tpu.memory_space<vmem>>, %arg7: memref<3x1x1x8xf32, #tpu.memory_space<vmem>>, %arg8: memref<3x1x16x8xbf16, #tpu.memory_space<vmem>>, %arg9: memref<3x1x16x8xf32, #tpu.memory_space<vmem>>) attributes {dimension_semantics = [#tpu.dimension_semantics<parallel>, #tpu.dimension_semantics<parallel>, #tpu.dimension_semantics<arbitrary>], iteration_bounds = array<i64: 1, 4, 1>, scalar_prefetch = 0 : i64, scratch_operands = 1 : i64, tpu.core_type = #tpu.core_type<tc>, window_params = [{transform_indices = @transform_0, window_bounds = array<i64: 16, 32>}, {transform_indices = @transform_1, window_bounds = array<i64: 16, 32>}, {transform_indices = @transform_2, window_bounds = array<i64: 16, 32>}, {transform_indices = @transform_3, window_bounds = array<i64: 3, 1, 32, 8>}, {transform_indices = @transform_4, window_bounds = array<i64: 3, 1, 1, 8>}, {transform_indices = @transform_5, window_bounds = array<i64: 3, 1, 16, 8>}]} {
    %c0_i32 = arith.constant 0 : i32
    %0 = arith.cmpi eq, %arg2, %c0_i32 : i32
    %1 = arith.extui %0 : i1 to i32
    %c0_i32_0 = arith.constant 0 : i32
    %2 = arith.cmpi ne, %1, %c0_i32_0 : i32
    scf.if %2 {
      %cst_44 = arith.constant 0.000000e+00 : f32
      %36 = vector.broadcast %cst_44 : f32 to vector<3x1x16x8xf32>
      %c0_45 = arith.constant 0 : index
      %c0_46 = arith.constant 0 : index
      %c0_47 = arith.constant 0 : index
      %c0_48 = arith.constant 0 : index
      %37 = vector.load %arg9[%c0_45, %c0_46, %c0_47, %c0_48] : memref<3x1x16x8xf32, #tpu.memory_space<vmem>>, vector<3x1x16x8xf32>
      tpu.vector_store %arg9[%c0_45, %c0_46, %c0_47, %c0_48], %36 {strides = array<i32>} : memref<3x1x16x8xf32, #tpu.memory_space<vmem>>, vector<3x1x16x8xf32>,
    } else {
    }
    %c0 = arith.constant 0 : index
    %c0_1 = arith.constant 0 : index
    %c0_2 = arith.constant 0 : index
    %c0_3 = arith.constant 0 : index
    %3 = vector.load %arg9[%c0, %c0_1, %c0_2, %c0_3] : memref<3x1x16x8xf32, #tpu.memory_space<vmem>>, vector<1x1x16x8xf32>
    %4 = vector.shape_cast %3 : vector<1x1x16x8xf32> to vector<16x8xf32>
    %c0_4 = arith.constant 0 : index
    %c0_5 = arith.constant 0 : index
    %5 = vector.load %arg3[%c0_4, %c0_5] : memref<16x32xbf16, #tpu.memory_space<vmem>>, vector<16x32xbf16>
    %c0_6 = arith.constant 0 : index
    %c0_7 = arith.constant 0 : index
    %c0_8 = arith.constant 0 : index
    %c0_9 = arith.constant 0 : index
    %6 = vector.load %arg6[%c0_6, %c0_7, %c0_8, %c0_9] : memref<3x1x32x8xbf16, #tpu.memory_space<vmem>>, vector<1x1x32x8xbf16>
    %7 = vector.shape_cast %6 : vector<1x1x32x8xbf16> to vector<32x8xbf16>
    %cst = arith.constant dense<0.000000e+00> : vector<16x8xf32>
    %8 = tpu.matmul %5, %7, %cst {dimension_numbers = #tpu.dot_dimension_numbers<[1], [0], [0], [1], [0, 0, 1, 1], [], []>} : vector<16x32xbf16>, vector<32x8xbf16>, vector<16x8xf32> -> vector<16x8xf32>
    %9 = arith.addf %4, %8 : vector<16x8xf32>
    %c0_10 = arith.constant 0 : index
    %c0_11 = arith.constant 0 : index
    %c0_12 = arith.constant 0 : index
    %c0_13 = arith.constant 0 : index
    %10 = vector.load %arg9[%c0_10, %c0_11, %c0_12, %c0_13] : memref<3x1x16x8xf32, #tpu.memory_space<vmem>>, vector<1x1x16x8xf32>
    %11 = vector.shape_cast %10 : vector<1x1x16x8xf32> to vector<16x8xf32>
    %12 = vector.shape_cast %9 : vector<16x8xf32> to vector<1x1x16x8xf32>
    tpu.vector_store %arg9[%c0_10, %c0_11, %c0_12, %c0_13], %12 {strides = array<i32>} : memref<3x1x16x8xf32, #tpu.memory_space<vmem>>, vector<1x1x16x8xf32>,
    %c1 = arith.constant 1 : index
    %c0_14 = arith.constant 0 : index
    %c0_15 = arith.constant 0 : index
    %c0_16 = arith.constant 0 : index
    %13 = vector.load %arg9[%c1, %c0_14, %c0_15, %c0_16] : memref<3x1x16x8xf32, #tpu.memory_space<vmem>>, vector<1x1x16x8xf32>
    %14 = vector.shape_cast %13 : vector<1x1x16x8xf32> to vector<16x8xf32>
    %c0_17 = arith.constant 0 : index
    %c0_18 = arith.constant 0 : index
    %15 = vector.load %arg4[%c0_17, %c0_18] : memref<16x32xbf16, #tpu.memory_space<vmem>>, vector<16x32xbf16>
    %c1_19 = arith.constant 1 : index
    %c0_20 = arith.constant 0 : index
    %c0_21 = arith.constant 0 : index
    %c0_22 = arith.constant 0 : index
    %16 = vector.load %arg6[%c1_19, %c0_20, %c0_21, %c0_22] : memref<3x1x32x8xbf16, #tpu.memory_space<vmem>>, vector<1x1x32x8xbf16>
    %17 = vector.shape_cast %16 : vector<1x1x32x8xbf16> to vector<32x8xbf16>
    %cst_23 = arith.constant dense<0.000000e+00> : vector<16x8xf32>
    %18 = tpu.matmul %15, %17, %cst_23 {dimension_numbers = #tpu.dot_dimension_numbers<[1], [0], [0], [1], [0, 0, 1, 1], [], []>} : vector<16x32xbf16>, vector<32x8xbf16>, vector<16x8xf32> -> vector<16x8xf32>
    %19 = arith.addf %14, %18 : vector<16x8xf32>
    %c1_24 = arith.constant 1 : index
    %c0_25 = arith.constant 0 : index
    %c0_26 = arith.constant 0 : index
    %c0_27 = arith.constant 0 : index
    %20 = vector.load %arg9[%c1_24, %c0_25, %c0_26, %c0_27] : memref<3x1x16x8xf32, #tpu.memory_space<vmem>>, vector<1x1x16x8xf32>
    %21 = vector.shape_cast %20 : vector<1x1x16x8xf32> to vector<16x8xf32>
    %22 = vector.shape_cast %19 : vector<16x8xf32> to vector<1x1x16x8xf32>
    tpu.vector_store %arg9[%c1_24, %c0_25, %c0_26, %c0_27], %22 {strides = array<i32>} : memref<3x1x16x8xf32, #tpu.memory_space<vmem>>, vector<1x1x16x8xf32>,
    %c2 = arith.constant 2 : index
    %c0_28 = arith.constant 0 : index
    %c0_29 = arith.constant 0 : index
    %c0_30 = arith.constant 0 : index
    %23 = vector.load %arg9[%c2, %c0_28, %c0_29, %c0_30] : memref<3x1x16x8xf32, #tpu.memory_space<vmem>>, vector<1x1x16x8xf32>
    %24 = vector.shape_cast %23 : vector<1x1x16x8xf32> to vector<16x8xf32>
    %c0_31 = arith.constant 0 : index
    %c0_32 = arith.constant 0 : index
    %25 = vector.load %arg5[%c0_31, %c0_32] : memref<16x32xbf16, #tpu.memory_space<vmem>>, vector<16x32xbf16>
    %c2_33 = arith.constant 2 : index
    %c0_34 = arith.constant 0 : index
    %c0_35 = arith.constant 0 : index
    %c0_36 = arith.constant 0 : index
    %26 = vector.load %arg6[%c2_33, %c0_34, %c0_35, %c0_36] : memref<3x1x32x8xbf16, #tpu.memory_space<vmem>>, vector<1x1x32x8xbf16>
    %27 = vector.shape_cast %26 : vector<1x1x32x8xbf16> to vector<32x8xbf16>
    %cst_37 = arith.constant dense<0.000000e+00> : vector<16x8xf32>
    %28 = tpu.matmul %25, %27, %cst_37 {dimension_numbers = #tpu.dot_dimension_numbers<[1], [0], [0], [1], [0, 0, 1, 1], [], []>} : vector<16x32xbf16>, vector<32x8xbf16>, vector<16x8xf32> -> vector<16x8xf32>
    %29 = arith.addf %24, %28 : vector<16x8xf32>
    %c2_38 = arith.constant 2 : index
    %c0_39 = arith.constant 0 : index
    %c0_40 = arith.constant 0 : index
    %c0_41 = arith.constant 0 : index
    %30 = vector.load %arg9[%c2_38, %c0_39, %c0_40, %c0_41] : memref<3x1x16x8xf32, #tpu.memory_space<vmem>>, vector<1x1x16x8xf32>
    %31 = vector.shape_cast %30 : vector<1x1x16x8xf32> to vector<16x8xf32>
    %32 = vector.shape_cast %29 : vector<16x8xf32> to vector<1x1x16x8xf32>
    tpu.vector_store %arg9[%c2_38, %c0_39, %c0_40, %c0_41], %32 {strides = array<i32>} : memref<3x1x16x8xf32, #tpu.memory_space<vmem>>, vector<1x1x16x8xf32>,
    %c0_i32_42 = arith.constant 0 : i32
    %33 = arith.cmpi eq, %arg2, %c0_i32_42 : i32
    %34 = arith.extui %33 : i1 to i32
    %c0_i32_43 = arith.constant 0 : i32
    %35 = arith.cmpi ne, %34, %c0_i32_43 : i32
    scf.if %35 {
      %c0_44 = arith.constant 0 : index
      %c0_45 = arith.constant 0 : index
      %c0_46 = arith.constant 0 : index
      %c0_47 = arith.constant 0 : index
      %36 = vector.load %arg9[%c0_44, %c0_45, %c0_46, %c0_47] : memref<3x1x16x8xf32, #tpu.memory_space<vmem>>, vector<3x1x16x8xf32>
      %c0_48 = arith.constant 0 : index
      %c0_49 = arith.constant 0 : index
      %c0_50 = arith.constant 0 : index
      %c0_51 = arith.constant 0 : index
      %37 = vector.load %arg7[%c0_48, %c0_49, %c0_50, %c0_51] : memref<3x1x1x8xf32, #tpu.memory_space<vmem>>, vector<3x1x1x8xf32>
      %38 = vector.broadcast %37 : vector<3x1x1x8xf32> to vector<3x1x16x8xf32>
      %39 = arith.addf %36, %38 : vector<3x1x16x8xf32>
      %40 = arith.truncf %39 : vector<3x1x16x8xf32> to vector<3x1x16x8xbf16>
      %c0_52 = arith.constant 0 : index
      %c0_53 = arith.constant 0 : index
      %c0_54 = arith.constant 0 : index
      %c0_55 = arith.constant 0 : index
      %41 = vector.load %arg8[%c0_52, %c0_53, %c0_54, %c0_55] : memref<3x1x16x8xbf16, #tpu.memory_space<vmem>>, vector<3x1x16x8xbf16>
      tpu.vector_store %arg8[%c0_52, %c0_53, %c0_54, %c0_55], %40 {strides = array<i32>} : memref<3x1x16x8xbf16, #tpu.memory_space<vmem>>, vector<3x1x16x8xbf16>,
    } else {
    }
    return
  }
  func.func @transform_0(%arg0: i32, %arg1: i32, %arg2: i32) -> (i32, i32) {
    %c0_i32 = arith.constant 0 : i32
    return %arg0, %arg2 : i32, i32
  }
  func.func @transform_1(%arg0: i32, %arg1: i32, %arg2: i32) -> (i32, i32) {
    %c0_i32 = arith.constant 0 : i32
    return %arg0, %arg2 : i32, i32
  }
  func.func @transform_2(%arg0: i32, %arg1: i32, %arg2: i32) -> (i32, i32) {
    %c0_i32 = arith.constant 0 : i32
    return %arg0, %arg2 : i32, i32
  }
  func.func @transform_3(%arg0: i32, %arg1: i32, %arg2: i32) -> (i32, i32, i32, i32) {
    %c0_i32 = arith.constant 0 : i32
    %c0_i32_0 = arith.constant 0 : i32
    %c0_i32_1 = arith.constant 0 : i32
    return %c0_i32, %arg1, %arg2, %c0_i32_0 : i32, i32, i32, i32
  }
  func.func @transform_4(%arg0: i32, %arg1: i32, %arg2: i32) -> (i32, i32, i32, i32) {
    %c0_i32 = arith.constant 0 : i32
    %c0_i32_0 = arith.constant 0 : i32
    %c0_i32_1 = arith.constant 0 : i32
    %c0_i32_2 = arith.constant 0 : i32
    return %c0_i32, %arg1, %c0_i32_0, %c0_i32_1 : i32, i32, i32, i32
  }
  func.func @transform_5(%arg0: i32, %arg1: i32, %arg2: i32) -> (i32, i32, i32, i32) {
    %c0_i32 = arith.constant 0 : i32
    %c0_i32_0 = arith.constant 0 : i32
    %c0_i32_1 = arith.constant 0 : i32
    return %c0_i32, %arg1, %arg0, %c0_i32_0 : i32, i32, i32, i32
  }
}

module attributes {stable_mosaic.version = 11 : i64} {
  func.func @_attention_kernel(%arg0: i32, %arg1: i32, %arg2: i32, %arg3: memref<2x1xi32, #tpu.memory_space<smem>>, %arg4: memref<1x4x1x8x8xbf16, #tpu.memory_space<vmem>>, %arg5: memref<1x4x1x8x8xbf16, #tpu.memory_space<vmem>>, %arg6: memref<1x4x1x8x8xbf16, #tpu.memory_space<vmem>>, %arg7: memref<1x1x8x8xbf16, #tpu.memory_space<vmem>>, %arg8: memref<32x32xbf16, #tpu.memory_space<vmem>>, %arg9: memref<1x32xf32, #tpu.memory_space<vmem>>, %arg10: memref<1x8x32xf32, #tpu.memory_space<vmem>>, %arg11: memref<4x8x1xf32, #tpu.memory_space<vmem>>, %arg12: memref<4x8x1xf32, #tpu.memory_space<vmem>>, %arg13: memref<4x8x8xf32, #tpu.memory_space<vmem>>, %arg14: memref<8x32xbf16, #tpu.memory_space<vmem>>) attributes {dimension_semantics = [#tpu.dimension_semantics<parallel>, #tpu.dimension_semantics<parallel>, #tpu.dimension_semantics<arbitrary>], iteration_bounds = array<i64: 2, 1, 1>, scalar_prefetch = 1 : i64, scratch_operands = 4 : i64, tpu.core_type = #tpu.core_type<tc>, window_params = [{transform_indices = @transform_0, window_bounds = array<i64: 1, 4, 1, 8, 8>}, {transform_indices = @transform_1, window_bounds = array<i64: 1, 4, 1, 8, 8>}, {transform_indices = @transform_2, window_bounds = array<i64: 1, 4, 1, 8, 8>}, {transform_indices = @transform_3, window_bounds = array<i64: 1, 1, 8, 8>}, {pipeline_mode = #tpu.pipeline_mode<synchronous>, transform_indices = @transform_4, window_bounds = array<i64: 32, 32>}, {pipeline_mode = #tpu.pipeline_mode<synchronous>, transform_indices = @transform_5, window_bounds = array<i64: 1, 32>}, {transform_indices = @transform_6, window_bounds = array<i64: 1, 8, 32>}]} {
    %c0_i32 = arith.constant 0 : i32
    %0 = arith.cmpi eq, %arg2, %c0_i32 : i32
    %1 = arith.extui %0 : i1 to i32
    %c0_i32_0 = arith.constant 0 : i32
    %2 = arith.cmpi ne, %1, %c0_i32_0 : i32
    scf.if %2 {
      %cst = arith.constant 0xFF800000 : f32
      %14 = vector.broadcast %cst : f32 to vector<4x8x1xf32>
      %c0 = arith.constant 0 : index
      %c0_5 = arith.constant 0 : index
      %c0_6 = arith.constant 0 : index
      %15 = vector.load %arg11[%c0, %c0_5, %c0_6] : memref<4x8x1xf32, #tpu.memory_space<vmem>>, vector<4x8x1xf32>
      tpu.vector_store %arg11[%c0, %c0_5, %c0_6], %14 {strides = array<i32>} : memref<4x8x1xf32, #tpu.memory_space<vmem>>, vector<4x8x1xf32>,
      %cst_7 = arith.constant 0.000000e+00 : f32
      %16 = vector.broadcast %cst_7 : f32 to vector<4x8x1xf32>
      %c0_8 = arith.constant 0 : index
      %c0_9 = arith.constant 0 : index
      %c0_10 = arith.constant 0 : index
      %17 = vector.load %arg12[%c0_8, %c0_9, %c0_10] : memref<4x8x1xf32, #tpu.memory_space<vmem>>, vector<4x8x1xf32>
      tpu.vector_store %arg12[%c0_8, %c0_9, %c0_10], %16 {strides = array<i32>} : memref<4x8x1xf32, #tpu.memory_space<vmem>>, vector<4x8x1xf32>,
      %cst_11 = arith.constant 0.000000e+00 : f32
      %18 = vector.broadcast %cst_11 : f32 to vector<4x8x8xf32>
      %c0_12 = arith.constant 0 : index
      %c0_13 = arith.constant 0 : index
      %c0_14 = arith.constant 0 : index
      %19 = vector.load %arg13[%c0_12, %c0_13, %c0_14] : memref<4x8x8xf32, #tpu.memory_space<vmem>>, vector<4x8x8xf32>
      tpu.vector_store %arg13[%c0_12, %c0_13, %c0_14], %18 {strides = array<i32>} : memref<4x8x8xf32, #tpu.memory_space<vmem>>, vector<4x8x8xf32>,
    } else {
    }
    %c1_i32 = arith.constant 1 : i32
    %3 = arith.muli %arg0, %c1_i32 : i32
    %4 = arith.addi %3, %arg1 : i32
    %5 = arith.index_cast %4 : i32 to index
    %6 = arith.index_cast %arg2 : i32 to index
    %7 = memref.load %arg3[%5, %6] : memref<2x1xi32, #tpu.memory_space<smem>>
    %c0_i32_1 = arith.constant 0 : i32
    %8 = arith.cmpi sgt, %7, %c0_i32_1 : i32
    %9 = arith.extui %8 : i1 to i32
    %c0_i32_2 = arith.constant 0 : i32
    %10 = arith.cmpi ne, %9, %c0_i32_2 : i32
    scf.if %10 {
      %c0 = arith.constant 0 : index
      %c0_5 = arith.constant 0 : index
      %c0_6 = arith.constant 0 : index
      %c0_7 = arith.constant 0 : index
      %c0_8 = arith.constant 0 : index
      %14 = vector.load %arg4[%c0, %c0_5, %c0_6, %c0_7, %c0_8] : memref<1x4x1x8x8xbf16, #tpu.memory_space<vmem>>, vector<1x4x1x8x8xbf16>
      %15 = vector.shape_cast %14 : vector<1x4x1x8x8xbf16> to vector<4x8x8xbf16>
      %c0_9 = arith.constant 0 : index
      %c0_10 = arith.constant 0 : index
      %c0_11 = arith.constant 0 : index
      %c0_12 = arith.constant 0 : index
      %c0_13 = arith.constant 0 : index
      %16 = vector.load %arg5[%c0_9, %c0_10, %c0_11, %c0_12, %c0_13] : memref<1x4x1x8x8xbf16, #tpu.memory_space<vmem>>, vector<1x4x1x8x8xbf16>
      %17 = vector.shape_cast %16 : vector<1x4x1x8x8xbf16> to vector<4x8x8xbf16>
      %c0_14 = arith.constant 0 : index
      %c0_15 = arith.constant 0 : index
      %c0_16 = arith.constant 0 : index
      %c0_17 = arith.constant 0 : index
      %c0_18 = arith.constant 0 : index
      %18 = vector.load %arg6[%c0_14, %c0_15, %c0_16, %c0_17, %c0_18] : memref<1x4x1x8x8xbf16, #tpu.memory_space<vmem>>, vector<1x4x1x8x8xbf16>
      %19 = vector.shape_cast %18 : vector<1x4x1x8x8xbf16> to vector<4x8x8xbf16>
      %c0_19 = arith.constant 0 : index
      %c0_20 = arith.constant 0 : index
      %c0_21 = arith.constant 0 : index
      %c0_22 = arith.constant 0 : index
      %20 = vector.load %arg7[%c0_19, %c0_20, %c0_21, %c0_22] : memref<1x1x8x8xbf16, #tpu.memory_space<vmem>>, vector<1x1x8x8xbf16>
      %21 = vector.shape_cast %20 : vector<1x1x8x8xbf16> to vector<8x8xbf16>
      %22 = arith.extf %21 : vector<8x8xbf16> to vector<8x8xf32>
      "tpu.trace_start"() <{level = 10 : i32, message = "hqd,hkd->hqk"}> : () -> ()
      %cst = arith.constant dense<0.000000e+00> : vector<4x8x8xf32>
      %23 = tpu.matmul %15, %17, %cst {dimension_numbers = #tpu.dot_dimension_numbers<[2], [2], [1], [1], [0, 0, 0, 1, 1, 1], [0], [0]>} : vector<4x8x8xbf16>, vector<4x8x8xbf16>, vector<4x8x8xf32> -> vector<4x8x8xf32>
      "tpu.trace_stop"() : () -> ()
      %24 = vector.shape_cast %22 : vector<8x8xf32> to vector<1x8x8xf32>
      %25 = vector.broadcast %24 : vector<1x8x8xf32> to vector<4x8x8xf32>
      %26 = arith.addf %23, %25 : vector<4x8x8xf32>
      %c0_23 = arith.constant 0 : index
      %c0_24 = arith.constant 0 : index
      %c0_25 = arith.constant 0 : index
      %27 = vector.load %arg11[%c0_23, %c0_24, %c0_25] : memref<4x8x1xf32, #tpu.memory_space<vmem>>, vector<4x8x1xf32>
      %cst_26 = arith.constant dense<0xFF800000> : vector<4x8xf32>
      %28 = vector.multi_reduction <maximumf>, %26, %cst_26 [2] : vector<4x8x8xf32> to vector<4x8xf32>
      %29 = vector.shape_cast %28 : vector<4x8xf32> to vector<4x8x1xf32>
      %30 = arith.maximumf %27, %29 : vector<4x8x1xf32>
      %31 = arith.subf %27, %30 : vector<4x8x1xf32>
      %32 = math.exp %31 : vector<4x8x1xf32>
      %33 = vector.broadcast %30 : vector<4x8x1xf32> to vector<4x8x8xf32>
      %34 = arith.subf %26, %33 : vector<4x8x8xf32>
      %35 = math.exp %34 : vector<4x8x8xf32>
      %c0_27 = arith.constant 0 : index
      %c0_28 = arith.constant 0 : index
      %c0_29 = arith.constant 0 : index
      %36 = vector.load %arg12[%c0_27, %c0_28, %c0_29] : memref<4x8x1xf32, #tpu.memory_space<vmem>>, vector<4x8x1xf32>
      %37 = arith.mulf %32, %36 : vector<4x8x1xf32>
      %cst_30 = arith.constant dense<0.000000e+00> : vector<4x8xf32>
      %38 = vector.multi_reduction <add>, %35, %cst_30 [2] : vector<4x8x8xf32> to vector<4x8xf32>
      %39 = vector.shape_cast %38 : vector<4x8xf32> to vector<4x8x1xf32>
      %40 = arith.addf %37, %39 : vector<4x8x1xf32>
      %c0_31 = arith.constant 0 : index
      %c0_32 = arith.constant 0 : index
      %c0_33 = arith.constant 0 : index
      %41 = vector.load %arg12[%c0_31, %c0_32, %c0_33] : memref<4x8x1xf32, #tpu.memory_space<vmem>>, vector<4x8x1xf32>
      tpu.vector_store %arg12[%c0_31, %c0_32, %c0_33], %40 {strides = array<i32>} : memref<4x8x1xf32, #tpu.memory_space<vmem>>, vector<4x8x1xf32>,
      %c0_34 = arith.constant 0 : index
      %c0_35 = arith.constant 0 : index
      %c0_36 = arith.constant 0 : index
      %42 = vector.load %arg13[%c0_34, %c0_35, %c0_36] : memref<4x8x8xf32, #tpu.memory_space<vmem>>, vector<4x8x8xf32>
      %43 = vector.broadcast %32 : vector<4x8x1xf32> to vector<4x8x8xf32>
      %44 = arith.mulf %43, %42 : vector<4x8x8xf32>
      %45 = arith.truncf %35 : vector<4x8x8xf32> to vector<4x8x8xbf16>
      "tpu.trace_start"() <{level = 10 : i32, message = "hqk,hkd->hqd"}> : () -> ()
      %cst_37 = arith.constant dense<0.000000e+00> : vector<4x8x8xf32>
      %46 = tpu.matmul %45, %19, %cst_37 {dimension_numbers = #tpu.dot_dimension_numbers<[2], [1], [1], [2], [0, 0, 0, 1, 1, 2], [0], [0]>} : vector<4x8x8xbf16>, vector<4x8x8xbf16>, vector<4x8x8xf32> -> vector<4x8x8xf32>
      "tpu.trace_stop"() : () -> ()
      %47 = arith.addf %44, %46 : vector<4x8x8xf32>
      %c0_38 = arith.constant 0 : index
      %c0_39 = arith.constant 0 : index
      %c0_40 = arith.constant 0 : index
      %48 = vector.load %arg13[%c0_38, %c0_39, %c0_40] : memref<4x8x8xf32, #tpu.memory_space<vmem>>, vector<4x8x8xf32>
      tpu.vector_store %arg13[%c0_38, %c0_39, %c0_40], %47 {strides = array<i32>} : memref<4x8x8xf32, #tpu.memory_space<vmem>>, vector<4x8x8xf32>,
      %c0_41 = arith.constant 0 : index
      %c0_42 = arith.constant 0 : index
      %c0_43 = arith.constant 0 : index
      %49 = vector.load %arg11[%c0_41, %c0_42, %c0_43] : memref<4x8x1xf32, #tpu.memory_space<vmem>>, vector<4x8x1xf32>
      tpu.vector_store %arg11[%c0_41, %c0_42, %c0_43], %30 {strides = array<i32>} : memref<4x8x1xf32, #tpu.memory_space<vmem>>, vector<4x8x1xf32>,
    } else {
    }
    %c0_i32_3 = arith.constant 0 : i32
    %11 = arith.cmpi eq, %arg2, %c0_i32_3 : i32
    %12 = arith.extui %11 : i1 to i32
    %c0_i32_4 = arith.constant 0 : i32
    %13 = arith.cmpi ne, %12, %c0_i32_4 : i32
    scf.if %13 {
      %c0 = arith.constant 0 : index
      %c0_5 = arith.constant 0 : index
      %c0_6 = arith.constant 0 : index
      %14 = vector.load %arg12[%c0, %c0_5, %c0_6] : memref<4x8x1xf32, #tpu.memory_space<vmem>>, vector<4x8x1xf32>
      %cst = arith.constant 0.000000e+00 : f32
      %15 = vector.broadcast %cst : f32 to vector<4x8x1xf32>
      %16 = arith.cmpf ogt, %14, %15 : vector<4x8x1xf32>
      %cst_7 = arith.constant 1.000000e+00 : f32
      %17 = vector.broadcast %cst_7 : f32 to vector<4x8x1xf32>
      %18 = arith.select %16, %14, %17 : vector<4x8x1xi1>, vector<4x8x1xf32>
      %19 = tpu.reciprocal %18 {approx = true} : vector<4x8x1xf32> -> vector<4x8x1xf32>
      %c0_8 = arith.constant 0 : index
      %c0_9 = arith.constant 0 : index
      %c0_10 = arith.constant 0 : index
      %20 = vector.load %arg13[%c0_8, %c0_9, %c0_10] : memref<4x8x8xf32, #tpu.memory_space<vmem>>, vector<1x8x8xf32>
      %21 = vector.shape_cast %20 : vector<1x8x8xf32> to vector<8x8xf32>
      %22 = vector.extract_strided_slice %19 {offsets = [0, 0, 0], sizes = [1, 8, 1], strides = [1, 1, 1]} : vector<4x8x1xf32> to vector<1x8x1xf32>
      %23 = vector.shape_cast %22 : vector<1x8x1xf32> to vector<8x1xf32>
      %24 = vector.broadcast %23 : vector<8x1xf32> to vector<8x8xf32>
      %25 = arith.mulf %21, %24 : vector<8x8xf32>
      %26 = arith.truncf %25 : vector<8x8xf32> to vector<8x8xbf16>
      %c0_11 = arith.constant 0 : index
      %c0_12 = arith.constant 0 : index
      %27 = vector.load %arg14[%c0_11, %c0_12] : memref<8x32xbf16, #tpu.memory_space<vmem>>, vector<8x8xbf16>
      tpu.vector_store %arg14[%c0_11, %c0_12], %26 {strides = array<i32>} : memref<8x32xbf16, #tpu.memory_space<vmem>>, vector<8x8xbf16>,
      %c1 = arith.constant 1 : index
      %c0_13 = arith.constant 0 : index
      %c0_14 = arith.constant 0 : index
      %28 = vector.load %arg13[%c1, %c0_13, %c0_14] : memref<4x8x8xf32, #tpu.memory_space<vmem>>, vector<1x8x8xf32>
      %29 = vector.shape_cast %28 : vector<1x8x8xf32> to vector<8x8xf32>
      %30 = vector.extract_strided_slice %19 {offsets = [1, 0, 0], sizes = [1, 8, 1], strides = [1, 1, 1]} : vector<4x8x1xf32> to vector<1x8x1xf32>
      %31 = vector.shape_cast %30 : vector<1x8x1xf32> to vector<8x1xf32>
      %32 = vector.broadcast %31 : vector<8x1xf32> to vector<8x8xf32>
      %33 = arith.mulf %29, %32 : vector<8x8xf32>
      %34 = arith.truncf %33 : vector<8x8xf32> to vector<8x8xbf16>
      %c0_15 = arith.constant 0 : index
      %c8 = arith.constant 8 : index
      %35 = vector.load %arg14[%c0_15, %c8] : memref<8x32xbf16, #tpu.memory_space<vmem>>, vector<8x8xbf16>
      tpu.vector_store %arg14[%c0_15, %c8], %34 {strides = array<i32>} : memref<8x32xbf16, #tpu.memory_space<vmem>>, vector<8x8xbf16>,
      %c2 = arith.constant 2 : index
      %c0_16 = arith.constant 0 : index
      %c0_17 = arith.constant 0 : index
      %36 = vector.load %arg13[%c2, %c0_16, %c0_17] : memref<4x8x8xf32, #tpu.memory_space<vmem>>, vector<1x8x8xf32>
      %37 = vector.shape_cast %36 : vector<1x8x8xf32> to vector<8x8xf32>
      %38 = vector.extract_strided_slice %19 {offsets = [2, 0, 0], sizes = [1, 8, 1], strides = [1, 1, 1]} : vector<4x8x1xf32> to vector<1x8x1xf32>
      %39 = vector.shape_cast %38 : vector<1x8x1xf32> to vector<8x1xf32>
      %40 = vector.broadcast %39 : vector<8x1xf32> to vector<8x8xf32>
      %41 = arith.mulf %37, %40 : vector<8x8xf32>
      %42 = arith.truncf %41 : vector<8x8xf32> to vector<8x8xbf16>
      %c0_18 = arith.constant 0 : index
      %c16 = arith.constant 16 : index
      %43 = vector.load %arg14[%c0_18, %c16] : memref<8x32xbf16, #tpu.memory_space<vmem>>, vector<8x8xbf16>
      tpu.vector_store %arg14[%c0_18, %c16], %42 {strides = array<i32>} : memref<8x32xbf16, #tpu.memory_space<vmem>>, vector<8x8xbf16>,
      %c3 = arith.constant 3 : index
      %c0_19 = arith.constant 0 : index
      %c0_20 = arith.constant 0 : index
      %44 = vector.load %arg13[%c3, %c0_19, %c0_20] : memref<4x8x8xf32, #tpu.memory_space<vmem>>, vector<1x8x8xf32>
      %45 = vector.shape_cast %44 : vector<1x8x8xf32> to vector<8x8xf32>
      %46 = vector.extract_strided_slice %19 {offsets = [3, 0, 0], sizes = [1, 8, 1], strides = [1, 1, 1]} : vector<4x8x1xf32> to vector<1x8x1xf32>
      %47 = vector.shape_cast %46 : vector<1x8x1xf32> to vector<8x1xf32>
      %48 = vector.broadcast %47 : vector<8x1xf32> to vector<8x8xf32>
      %49 = arith.mulf %45, %48 : vector<8x8xf32>
      %50 = arith.truncf %49 : vector<8x8xf32> to vector<8x8xbf16>
      %c0_21 = arith.constant 0 : index
      %c24 = arith.constant 24 : index
      %51 = vector.load %arg14[%c0_21, %c24] : memref<8x32xbf16, #tpu.memory_space<vmem>>, vector<8x8xbf16>
      tpu.vector_store %arg14[%c0_21, %c24], %50 {strides = array<i32>} : memref<8x32xbf16, #tpu.memory_space<vmem>>, vector<8x8xbf16>,
      %c0_22 = arith.constant 0 : index
      %c0_23 = arith.constant 0 : index
      %52 = vector.load %arg14[%c0_22, %c0_23] : memref<8x32xbf16, #tpu.memory_space<vmem>>, vector<8x32xbf16>
      %c0_24 = arith.constant 0 : index
      %c0_25 = arith.constant 0 : index
      %53 = vector.load %arg8[%c0_24, %c0_25] : memref<32x32xbf16, #tpu.memory_space<vmem>>, vector<32x32xbf16>
      %cst_26 = arith.constant dense<0.000000e+00> : vector<8x32xf32>
      %54 = tpu.matmul %52, %53, %cst_26 {dimension_numbers = #tpu.dot_dimension_numbers<[1], [0], [0], [1], [0, 0, 1, 1], [], []>} : vector<8x32xbf16>, vector<32x32xbf16>, vector<8x32xf32> -> vector<8x32xf32>
      %c0_27 = arith.constant 0 : index
      %c0_28 = arith.constant 0 : index
      %55 = vector.load %arg9[%c0_27, %c0_28] : memref<1x32xf32, #tpu.memory_space<vmem>>, vector<1x32xf32>
      %56 = vector.broadcast %55 : vector<1x32xf32> to vector<8x32xf32>
      %57 = arith.addf %54, %56 : vector<8x32xf32>
      %c0_29 = arith.constant 0 : index
      %c0_30 = arith.constant 0 : index
      %c0_31 = arith.constant 0 : index
      %58 = vector.load %arg10[%c0_29, %c0_30, %c0_31] : memref<1x8x32xf32, #tpu.memory_space<vmem>>, vector<1x8x32xf32>
      %59 = vector.shape_cast %58 : vector<1x8x32xf32> to vector<8x32xf32>
      %60 = vector.shape_cast %57 : vector<8x32xf32> to vector<1x8x32xf32>
      tpu.vector_store %arg10[%c0_29, %c0_30, %c0_31], %60 {strides = array<i32>} : memref<1x8x32xf32, #tpu.memory_space<vmem>>, vector<1x8x32xf32>,
    } else {
    }
    return
  }
  func.func @transform_0(%arg0: i32, %arg1: i32, %arg2: i32, %arg3: memref<2x1xi32, #tpu.memory_space<smem>>) -> (i32, i32, i32, i32, i32) {
    %c0_i32 = arith.constant 0 : i32
    %c0_i32_0 = arith.constant 0 : i32
    %c0_i32_1 = arith.constant 0 : i32
    %c0_i32_2 = arith.constant 0 : i32
    return %c0_i32, %c0_i32_0, %arg0, %arg1, %c0_i32_1 : i32, i32, i32, i32, i32
  }
  func.func @transform_1(%arg0: i32, %arg1: i32, %arg2: i32, %arg3: memref<2x1xi32, #tpu.memory_space<smem>>) -> (i32, i32, i32, i32, i32) {
    %c1_i32 = arith.constant 1 : i32
    %c0_i32 = arith.constant 0 : i32
    %c0_i32_0 = arith.constant 0 : i32
    %c0_i32_1 = arith.constant 0 : i32
    return %c1_i32, %c0_i32, %arg0, %arg2, %c0_i32_0 : i32, i32, i32, i32, i32
  }
  func.func @transform_2(%arg0: i32, %arg1: i32, %arg2: i32, %arg3: memref<2x1xi32, #tpu.memory_space<smem>>) -> (i32, i32, i32, i32, i32) {
    %c2_i32 = arith.constant 2 : i32
    %c0_i32 = arith.constant 0 : i32
    %c0_i32_0 = arith.constant 0 : i32
    %c0_i32_1 = arith.constant 0 : i32
    return %c2_i32, %c0_i32, %arg0, %arg2, %c0_i32_0 : i32, i32, i32, i32, i32
  }
  func.func @transform_3(%arg0: i32, %arg1: i32, %arg2: i32, %arg3: memref<2x1xi32, #tpu.memory_space<smem>>) -> (i32, i32, i32, i32) {
    %c0_i32 = arith.constant 0 : i32
    %c0_i32_0 = arith.constant 0 : i32
    return %arg0, %c0_i32, %arg1, %arg2 : i32, i32, i32, i32
  }
  func.func @transform_4(%arg0: i32, %arg1: i32, %arg2: i32, %arg3: memref<2x1xi32, #tpu.memory_space<smem>>) -> (i32, i32) {
    %c0_i32 = arith.constant 0 : i32
    %c0_i32_0 = arith.constant 0 : i32
    %c0_i32_1 = arith.constant 0 : i32
    return %c0_i32, %c0_i32_0 : i32, i32
  }
  func.func @transform_5(%arg0: i32, %arg1: i32, %arg2: i32, %arg3: memref<2x1xi32, #tpu.memory_space<smem>>) -> (i32, i32) {
    %c0_i32 = arith.constant 0 : i32
    %c0_i32_0 = arith.constant 0 : i32
    %c0_i32_1 = arith.constant 0 : i32
    return %c0_i32, %c0_i32_0 : i32, i32
  }
  func.func @transform_6(%arg0: i32, %arg1: i32, %arg2: i32, %arg3: memref<2x1xi32, #tpu.memory_space<smem>>) -> (i32, i32, i32) {
    %c0_i32 = arith.constant 0 : i32
    %c0_i32_0 = arith.constant 0 : i32
    return %arg0, %arg1, %c0_i32 : i32, i32, i32
  }
}

</mosaic_0001>

<llo_original>
// kernel: mha_forward.2
$region0: #{mha_forward.2}
  #allocation0 [shape = 'u32[]', space=smem, size = 0x4, offset = 0x4, fixed_abs, tag = 'smem constant byte address 0x4 - core index']
  #allocation1 [shape = 'u32[144,128]{1,0:T(1,128)}', space=vmem, size = 0x12000, scoped, tag = 'internal scratch']
  #allocation2 [shape = 'f32[3,1,16,8]{3,2,1,0:T(8,128)}', space=vmem, size = 0x6000, scoped, tag = 'scratch operand']
  %s0 = inlined_call_operand.vmem [shape: bf16[16,32], index: 0, kind: input, shape index: {}]
  %s1 = inlined_call_operand.vmem [shape: bf16[16,32], index: 1, kind: input, shape index: {}]
  %s2 = inlined_call_operand.vmem [shape: bf16[16,32], index: 2, kind: input, shape index: {}]
  %s3 = inlined_call_operand.vmem [shape: bf16[3,4,32,8], index: 3, kind: input, shape index: {}]
  %s4 = inlined_call_operand.vmem [shape: f32[3,4,1,8], index: 4, kind: input, shape index: {}]
  %s5 = inlined_call_operand.vmem [shape: bf16[3,4,16,8], index: 5, kind: output, shape index: {}]
  %s6 = sld [smem:[#allocation0]]
  $region173: #{mha_forward.2} parent=0
    _
  %s8 = ssub.s32 1, %s6
  %s9 = scalar_select 0, %s8, %s6
  $region1: #{mha_forward.2} parent=0
    #allocation3 [shape = 'u8[49152]{0}', space=vmem, size = 0xc000, scoped, tag = 'input window, operand 3']
    #allocation4 [shape = 'u8[3072]{0}', space=vmem, size = 0xc00, scoped, tag = 'input window, operand 4']
    #allocation5 [shape = 'u8[24576]{0}', space=vmem, size = 0x6000, scoped, tag = 'output window, operand 0']
    loop: start=0, step=1, limit=6
    $region2: #{mha_forward.2} parent=1 // loop_pre_header
      _
    $region3: #{mha_forward.2} parent=1 // loop_header
      %s11 = sphi 0, %s15
      %p12 = scmp.ge.s32.totalorder %s11, 6
      %s18 = sphi 0, %s37
      %s19 = sphi 0, %s33
      %s20 = sphi 0, %s29
      %s21 = sphi 0, %s18
      %s22 = sphi 0, %s19
      %s23 = sphi 0, %s20
      %s24 = sphi 0, %s21
      %s25 = sphi 0, %s22
      %s26 = sphi 0, %s23
      %s42 = sphi 0, %s44
      %s45 = sphi 0, %s42
      %s46 = sphi 0, %s45
      %s62 = sphi 0, %s46
      %s70 = sphi 0, %s72
      %s73 = sphi 0, %s70
      %s74 = sphi 0, %s73
      %s90 = sphi 0, %s74
      %s98 = sphi 0, %s100
      %s101 = sphi 0, %s98
      %s102 = sphi 0, %s101
      %s118 = sphi 0, %s102
      %s126 = sphi 0, %s128
      %s129 = sphi 0, %s126
      %s130 = sphi 0, %s129
      %s146 = sphi 0, %s130
      %s152 = sphi 0, %s154
      %s155 = sphi 0, %s152
      %s156 = sphi 0, %s155
      %s172 = sphi 0, %s156
      %s180 = sphi 0, %s182
      %s183 = sphi 0, %s180
      %s184 = sphi 0, %s183
      %s200 = sphi 0, %s184
    $region4: #{mha_forward.2} parent=1 // loop_header_branch
      %14 = sbr.rel (%p12) target = $region8
    $region5: #{mha_forward.2} parent=1 // loop_body
      %s16 = ssub.s32 %s11, 1
      %s17 = ssub.s32 %s11, 2
      %s27 = sadd.s32 1, %s20
      %p28 = scmp.ge.s32.totalorder %s27, 1
      %s29 = scalar_select %p28, 0, %s27
      %s30 = sadd.s32 1, %s19
      %s31 = scalar_select %p28, %s30, %s19
      %p32 = scmp.ge.s32.totalorder %s31, 4
      %s33 = scalar_select %p32, 0, %s31
      %s34 = sadd.s32 1, %s18
      %s35 = scalar_select %p32, %s34, %s18
      %p36 = scmp.ge.s32.totalorder %s35, 1
      %s37 = scalar_select %p36, 0, %s35
      %s38 = ssub.s32 %s18, %s37
      %s39 = ssub.s32 %s20, %s29
      %s40 = sor.u32 %s38, %s39
      %p41 = scmp.eq.s32.totalorder %s40, 0
      %s43 = sadd.s32 %s42, 1
      %s44 = scalar_select %p41, %s42, %s43
      %p47 = pneg %p41
      %p48 = scmp.eq.s32.totalorder %s11, 3
      %p49 = por %p47, %p48
      %p50 = scmp.ne.s32.totalorder %s42, %s45
      %p51 = scmp.eq.s32.totalorder %s11, 0
      %p52 = por %p50, %p51
      %p53 = scmp.ne.s32.totalorder %s42, %s45
      %p54 = scmp.eq.s32.totalorder %s16, 3
      %p55 = por %p53, %p54
      %p56 = scmp.ne.s32.totalorder %s45, %s46
      %p57 = scmp.eq.s32.totalorder %s16, 0
      %p58 = por %p56, %p57
      %p59 = scmp.ne.s32.totalorder %s45, %s46
      %p60 = scmp.eq.s32.totalorder %s17, 3
      %p61 = por %p59, %p60
      %p63 = scmp.ne.s32.totalorder %s46, %s62
      %p64 = scmp.eq.s32.totalorder %s17, 0
      %p65 = por %p63, %p64
      %s66 = ssub.s32 %s18, %s37
      %s67 = ssub.s32 %s20, %s29
      %s68 = sor.u32 %s66, %s67
      %p69 = scmp.eq.s32.totalorder %s68, 0
      %s71 = sadd.s32 %s70, 1
      %s72 = scalar_select %p69, %s70, %s71
      %p75 = pneg %p69
      %p76 = scmp.eq.s32.totalorder %s11, 3
      %p77 = por %p75, %p76
      %p78 = scmp.ne.s32.totalorder %s70, %s73
      %p79 = scmp.eq.s32.totalorder %s11, 0
      %p80 = por %p78, %p79
      %p81 = scmp.ne.s32.totalorder %s70, %s73
      %p82 = scmp.eq.s32.totalorder %s16, 3
      %p83 = por %p81, %p82
      %p84 = scmp.ne.s32.totalorder %s73, %s74
      %p85 = scmp.eq.s32.totalorder %s16, 0
      %p86 = por %p84, %p85
      %p87 = scmp.ne.s32.totalorder %s73, %s74
      %p88 = scmp.eq.s32.totalorder %s17, 3
      %p89 = por %p87, %p88
      %p91 = scmp.ne.s32.totalorder %s74, %s90
      %p92 = scmp.eq.s32.totalorder %s17, 0
      %p93 = por %p91, %p92
      %s94 = ssub.s32 %s18, %s37
      %s95 = ssub.s32 %s20, %s29
      %s96 = sor.u32 %s94, %s95
      %p97 = scmp.eq.s32.totalorder %s96, 0
      %s99 = sadd.s32 %s98, 1
      %s100 = scalar_select %p97, %s98, %s99
      %p103 = pneg %p97
      %p104 = scmp.eq.s32.totalorder %s11, 3
      %p105 = por %p103, %p104
      %p106 = scmp.ne.s32.totalorder %s98, %s101
      %p107 = scmp.eq.s32.totalorder %s11, 0
      %p108 = por %p106, %p107
      %p109 = scmp.ne.s32.totalorder %s98, %s101
      %p110 = scmp.eq.s32.totalorder %s16, 3
      %p111 = por %p109, %p110
      %p112 = scmp.ne.s32.totalorder %s101, %s102
      %p113 = scmp.eq.s32.totalorder %s16, 0
      %p114 = por %p112, %p113
      %p115 = scmp.ne.s32.totalorder %s101, %s102
      %p116 = scmp.eq.s32.totalorder %s17, 3
      %p117 = por %p115, %p116
      %p119 = scmp.ne.s32.totalorder %s102, %s118
      %p120 = scmp.eq.s32.totalorder %s17, 0
      %p121 = por %p119, %p120
      %s122 = ssub.s32 %s19, %s33
      %s123 = ssub.s32 %s20, %s29
      %s124 = sor.u32 %s122, %s123
      %p125 = scmp.eq.s32.totalorder %s124, 0
      %s127 = sadd.s32 %s126, 1
      %s128 = scalar_select %p125, %s126, %s127
      %p131 = pneg %p125
      %p132 = scmp.eq.s32.totalorder %s11, 3
      %p133 = por %p131, %p132
      %p134 = scmp.ne.s32.totalorder %s126, %s129
      %p135 = scmp.eq.s32.totalorder %s11, 0
      %p136 = por %p134, %p135
      %p137 = scmp.ne.s32.totalorder %s126, %s129
      %p138 = scmp.eq.s32.totalorder %s16, 3
      %p139 = por %p137, %p138
      %p140 = scmp.ne.s32.totalorder %s129, %s130
      %p141 = scmp.eq.s32.totalorder %s16, 0
      %p142 = por %p140, %p141
      %p143 = scmp.ne.s32.totalorder %s129, %s130
      %p144 = scmp.eq.s32.totalorder %s17, 3
      %p145 = por %p143, %p144
      %p147 = scmp.ne.s32.totalorder %s130, %s146
      %p148 = scmp.eq.s32.totalorder %s17, 0
      %p149 = por %p147, %p148
      %s150 = ssub.s32 %s19, %s33
      %p151 = scmp.eq.s32.totalorder %s150, 0
      %s153 = sadd.s32 %s152, 1
      %s154 = scalar_select %p151, %s152, %s153
      %p157 = pneg %p151
      %p158 = scmp.eq.s32.totalorder %s11, 3
      %p159 = por %p157, %p158
      %p160 = scmp.ne.s32.totalorder %s152, %s155
      %p161 = scmp.eq.s32.totalorder %s11, 0
      %p162 = por %p160, %p161
      %p163 = scmp.ne.s32.totalorder %s152, %s155
      %p164 = scmp.eq.s32.totalorder %s16, 3
      %p165 = por %p163, %p164
      %p166 = scmp.ne.s32.totalorder %s155, %s156
      %p167 = scmp.eq.s32.totalorder %s16, 0
      %p168 = por %p166, %p167
      %p169 = scmp.ne.s32.totalorder %s155, %s156
      %p170 = scmp.eq.s32.totalorder %s17, 3
      %p171 = por %p169, %p170
      %p173 = scmp.ne.s32.totalorder %s156, %s172
      %p174 = scmp.eq.s32.totalorder %s17, 0
      %p175 = por %p173, %p174
      %s176 = ssub.s32 %s19, %s33
      %s177 = ssub.s32 %s18, %s37
      %s178 = sor.u32 %s176, %s177
      %p179 = scmp.eq.s32.totalorder %s178, 0
      %s181 = sadd.s32 %s180, 1
      %s182 = scalar_select %p179, %s180, %s181
      %p185 = pneg %p179
      %p186 = scmp.eq.s32.totalorder %s11, 3
      %p187 = por %p185, %p186
      %p188 = scmp.ne.s32.totalorder %s180, %s183
      %p189 = scmp.eq.s32.totalorder %s11, 0
      %p190 = por %p188, %p189
      %p191 = scmp.ne.s32.totalorder %s180, %s183
      %p192 = scmp.eq.s32.totalorder %s16, 3
      %p193 = por %p191, %p192
      %p194 = scmp.ne.s32.totalorder %s183, %s184
      %p195 = scmp.eq.s32.totalorder %s16, 0
      %p196 = por %p194, %p195
      %p197 = scmp.ne.s32.totalorder %s183, %s184
      %p198 = scmp.eq.s32.totalorder %s17, 3
      %p199 = por %p197, %p198
      %p201 = scmp.ne.s32.totalorder %s184, %s200
      %p202 = scmp.eq.s32.totalorder %s17, 0
      %p203 = por %p201, %p202
      %p204 = scmp.le.s32.totalorder 1, %s11
      %p205 = scmp.lt.s32.totalorder %s11, 5
      %p206 = pnand %p204, %p205
      %p207 = pneg %p206
      // Predicated region
      $region9: #{mha_forward.2} parent=5 // pred_check
        _
      $region10: #{mha_forward.2} parent=5 // pred_check_branch
        %209 = sbr.rel (%p206) target = $region12
      $region11: #{mha_forward.2} parent=5 // pred_region
        %s210 = ssub.s32 %s11, 1
        // Predicated region
        $region13: #{mha_forward.2} parent=11 // pred_check
          %p211 = pneg %p58
        $region14: #{mha_forward.2} parent=11 // pred_check_branch
          %213 = sbr.rel (%p211) target = $region16
        $region15: #{mha_forward.2} parent=11 // pred_region
          %s214 = smul.u32 2, %s21
          %p215 = scmp.lt.s32.totalorder %s214, 1
          %s216 = scalar_select %p215, %s214, 1
          %p217 = scmp.lt.s32.totalorder %s23, 0
          %s218 = scalar_select %p217, %s23, 0
          %s219 = sadd.s32 %s218, %s216
          %s220 = smul.addr %s219, 4
          %s221 = scalar_lea.vmem %s0, %s220
          %s222 = smul.u32 2, %s21
        $region16: #{mha_forward.2} parent=11 // pred_fallthru
          _
        // Predicated region
        $region17: #{mha_forward.2} parent=11 // pred_check
          %p223 = pneg %p86
        $region18: #{mha_forward.2} parent=11 // pred_check_branch
          %225 = sbr.rel (%p223) target = $region20
        $region19: #{mha_forward.2} parent=11 // pred_region
          %s226 = smul.u32 2, %s21
          %p227 = scmp.lt.s32.totalorder %s226, 1
          %s228 = scalar_select %p227, %s226, 1
          %p229 = scmp.lt.s32.totalorder %s23, 0
          %s230 = scalar_select %p229, %s23, 0
          %s231 = sadd.s32 %s230, %s228
          %s232 = smul.addr %s231, 4
          %s233 = scalar_lea.vmem %s1, %s232
          %s234 = smul.u32 2, %s21
        $region20: #{mha_forward.2} parent=11 // pred_fallthru
          _
        // Predicated region
        $region21: #{mha_forward.2} parent=11 // pred_check
          %p235 = pneg %p114
        $region22: #{mha_forward.2} parent=11 // pred_check_branch
          %237 = sbr.rel (%p235) target = $region24
        $region23: #{mha_forward.2} parent=11 // pred_region
          %s238 = smul.u32 2, %s21
          %p239 = scmp.lt.s32.totalorder %s238, 1
          %s240 = scalar_select %p239, %s238, 1
          %p241 = scmp.lt.s32.totalorder %s23, 0
          %s242 = scalar_select %p241, %s23, 0
          %s243 = sadd.s32 %s242, %s240
          %s244 = smul.addr %s243, 4
          %s245 = scalar_lea.vmem %s2, %s244
          %s246 = smul.u32 2, %s21
        $region24: #{mha_forward.2} parent=11 // pred_fallthru
          _
      $region12: #{mha_forward.2} parent=5 // pred_fallthru
        _
      %p247 = scmp.lt.s32.totalorder %s11, 4
      // Predicated region
      $region25: #{mha_forward.2} parent=5 // pred_check
        %p248 = pneg %p247
      $region26: #{mha_forward.2} parent=5 // pred_check_branch
        %250 = sbr.rel (%p248) target = $region28
      $region27: #{mha_forward.2} parent=5 // pred_region
        // Predicated region
        $region29: #{mha_forward.2} parent=27 // pred_check
          %p251 = pneg %p136
        $region30: #{mha_forward.2} parent=27 // pred_check_branch
          %253 = sbr.rel (%p251) target = $region32
        $region31: #{mha_forward.2} parent=27 // pred_region
          %s254 = sand.u32 %s126, 1
          %s255 = sand.u32 %s126, 1
          %s256 = smul.addr %s255, 48
          %s257 = scalar_lea.vmem [#allocation3], %s256
          %s258 = smul.u32 4, %s20
          %s259 = smul.addr %s19, 4
          %s260 = sadd.s32 %s258, %s259
          %s261 = smul.addr %s260, 4
          %s262 = scalar_lea.vmem %s3, %s261
          // Predicated region
          $region33: #{mha_forward.2} parent=31 // pred_check
            _
          $region34: #{mha_forward.2} parent=31 // pred_check_branch
            %264 = sbr.rel (0) target = $region36
          $region35: #{mha_forward.2} parent=31 // pred_region
            // Predicated region
            $region37: #{mha_forward.2} parent=35 // pred_check
              _
            $region38: #{mha_forward.2} parent=35 // pred_check_branch
              %266 = sbr.rel target = $region40
            $region39: #{mha_forward.2} parent=35 // pred_region
              // Predicated region
              $region52: #{mha_forward.2} parent=39 // pred_check
                _
              $region53: #{mha_forward.2} parent=39 // pred_check_branch
                %304 = sbr.rel (0) target = $region55
              $region54: #{mha_forward.2} parent=39 // pred_region
                loop: start=0, step=1, limit=1
                $region56: #{mha_forward.2} parent=54 // loop_pre_header
                  _
                $region57: #{mha_forward.2} parent=54 // loop_header
                  %s306 = sphi 0, %s310
                  %p307 = scmp.ge.s32.totalorder %s306, 1
                  %s311 = sphi %s262, %s262
                  %s312 = sphi %s257, %s257
                $region58: #{mha_forward.2} parent=54 // loop_header_branch
                  %309 = sbr.rel (%p307) target = $region62
                $region59: #{mha_forward.2} parent=54 // loop_body
                  _
                $region60: #{mha_forward.2} parent=54 // loop_footer
                  %s310 = sadd.s32 1, %s306
                $region61: #{mha_forward.2} parent=54 // loop_footer_branch
                  %305 = sbr.rel target = $region57
                $region62: #{mha_forward.2} parent=54 // loop_exit
                  _
                %s314 = ssub.s32 16, 1
                loop: start=0, step=1, limit=1
                $region63: #{mha_forward.2} parent=54 // loop_pre_header
                  _
                $region64: #{mha_forward.2} parent=54 // loop_header
                  %s316 = sphi 0, %s320
                  %p317 = scmp.ge.s32.totalorder %s316, 1
                  %s321 = sphi %s262, %s262
                  %s322 = sphi %s257, %s257
                $region65: #{mha_forward.2} parent=54 // loop_header_branch
                  %319 = sbr.rel (%p317) target = $region69
                $region66: #{mha_forward.2} parent=54 // loop_body
                  %v323 = vld [vmem:[%s321] sm:%s314]
                  %324 = vst [vmem:[%s322] sm:%s314] %v323
                  %v325 = vld [vmem:[%s321 + $0x4] sm:%s314]
                  %326 = vst [vmem:[%s322 + $0x4] sm:%s314] %v325
                  %v327 = vld [vmem:[%s321 + $0x8] sm:%s314]
                  %328 = vst [vmem:[%s322 + $0x8] sm:%s314] %v327
                  %v329 = vld [vmem:[%s321 + $0xc] sm:%s314]
                  %330 = vst [vmem:[%s322 + $0xc] sm:%s314] %v329
                  %v331 = vld [vmem:[%s321 + $0x40] sm:%s314]
                  %332 = vst [vmem:[%s322 + $0x10] sm:%s314] %v331
                  %v333 = vld [vmem:[%s321 + $0x44] sm:%s314]
                  %334 = vst [vmem:[%s322 + $0x14] sm:%s314] %v333
                  %v335 = vld [vmem:[%s321 + $0x48] sm:%s314]
                  %336 = vst [vmem:[%s322 + $0x18] sm:%s314] %v335
                  %v337 = vld [vmem:[%s321 + $0x4c] sm:%s314]
                  %338 = vst [vmem:[%s322 + $0x1c] sm:%s314] %v337
                  %v339 = vld [vmem:[%s321 + $0x80] sm:%s314]
                  %340 = vst [vmem:[%s322 + $0x20] sm:%s314] %v339
                  %v341 = vld [vmem:[%s321 + $0x84] sm:%s314]
                  %342 = vst [vmem:[%s322 + $0x24] sm:%s314] %v341
                  %v343 = vld [vmem:[%s321 + $0x88] sm:%s314]
                  %344 = vst [vmem:[%s322 + $0x28] sm:%s314] %v343
                  %v345 = vld [vmem:[%s321 + $0x8c] sm:%s314]
                  %346 = vst [vmem:[%s322 + $0x2c] sm:%s314] %v345
                $region67: #{mha_forward.2} parent=54 // loop_footer
                  %s320 = sadd.s32 1, %s316
                $region68: #{mha_forward.2} parent=54 // loop_footer_branch
                  %315 = sbr.rel target = $region64
                $region69: #{mha_forward.2} parent=54 // loop_exit
                  _
              $region55: #{mha_forward.2} parent=39 // pred_fallthru
                _
            $region40: #{mha_forward.2} parent=35 // pred_fallthru
              _
            // Predicated region
            $region41: #{mha_forward.2} parent=35 // pred_check
              _
            $region42: #{mha_forward.2} parent=35 // pred_check_branch
              %268 = sbr.rel (0) target = $region44
            $region43: #{mha_forward.2} parent=35 // pred_region
              %s270 = ssub.s32 16, 1
              loop: start=0, step=1, limit=1
              $region45: #{mha_forward.2} parent=43 // loop_pre_header
                _
              $region46: #{mha_forward.2} parent=43 // loop_header
                %s272 = sphi 0, %s276
                %p273 = scmp.ge.s32.totalorder %s272, 1
                %s277 = sphi %s262, %s262
                %s278 = sphi %s257, %s257
              $region47: #{mha_forward.2} parent=43 // loop_header_branch
                %275 = sbr.rel (%p273) target = $region51
              $region48: #{mha_forward.2} parent=43 // loop_body
                %v279 = vld [vmem:[%s277] sm:%s270]
                %280 = vst [vmem:[%s278] sm:%s270] %v279
                %v281 = vld [vmem:[%s277 + $0x4] sm:%s270]
                %282 = vst [vmem:[%s278 + $0x4] sm:%s270] %v281
                %v283 = vld [vmem:[%s277 + $0x8] sm:%s270]
                %284 = vst [vmem:[%s278 + $0x8] sm:%s270] %v283
                %v285 = vld [vmem:[%s277 + $0xc] sm:%s270]
                %286 = vst [vmem:[%s278 + $0xc] sm:%s270] %v285
                %v287 = vld [vmem:[%s277 + $0x40] sm:%s270]
                %288 = vst [vmem:[%s278 + $0x10] sm:%s270] %v287
                %v289 = vld [vmem:[%s277 + $0x44] sm:%s270]
                %290 = vst [vmem:[%s278 + $0x14] sm:%s270] %v289
                %v291 = vld [vmem:[%s277 + $0x48] sm:%s270]
                %292 = vst [vmem:[%s278 + $0x18] sm:%s270] %v291
                %v293 = vld [vmem:[%s277 + $0x4c] sm:%s270]
                %294 = vst [vmem:[%s278 + $0x1c] sm:%s270] %v293
                %v295 = vld [vmem:[%s277 + $0x80] sm:%s270]
                %296 = vst [vmem:[%s278 + $0x20] sm:%s270] %v295
                %v297 = vld [vmem:[%s277 + $0x84] sm:%s270]
                %298 = vst [vmem:[%s278 + $0x24] sm:%s270] %v297
                %v299 = vld [vmem:[%s277 + $0x88] sm:%s270]
                %300 = vst [vmem:[%s278 + $0x28] sm:%s270] %v299
                %v301 = vld [vmem:[%s277 + $0x8c] sm:%s270]
                %302 = vst [vmem:[%s278 + $0x2c] sm:%s270] %v301
              $region49: #{mha_forward.2} parent=43 // loop_footer
                %s276 = sadd.s32 1, %s272
              $region50: #{mha_forward.2} parent=43 // loop_footer_branch
                %271 = sbr.rel target = $region46
              $region51: #{mha_forward.2} parent=43 // loop_exit
                _
            $region44: #{mha_forward.2} parent=35 // pred_fallthru
              _
          $region36: #{mha_forward.2} parent=31 // pred_fallthru
            _
          %347 = vnop
        $region32: #{mha_forward.2} parent=27 // pred_fallthru
          _
        // Predicated region
        $region70: #{mha_forward.2} parent=27 // pred_check
          %p348 = pneg %p162
        $region71: #{mha_forward.2} parent=27 // pred_check_branch
          %350 = sbr.rel (%p348) target = $region73
        $region72: #{mha_forward.2} parent=27 // pred_region
          %s351 = sand.u32 %s152, 1
          %s352 = sand.u32 %s152, 1
          %s353 = smul.addr %s352, 3
          %s354 = scalar_lea.vmem [#allocation4], %s353
          %s355 = scalar_lea.vmem %s4, %s19
          // Predicated region
          $region74: #{mha_forward.2} parent=72 // pred_check
            _
          $region75: #{mha_forward.2} parent=72 // pred_check_branch
            %357 = sbr.rel (0) target = $region77
          $region76: #{mha_forward.2} parent=72 // pred_region
            // Predicated region
            $region78: #{mha_forward.2} parent=76 // pred_check
              _
            $region79: #{mha_forward.2} parent=76 // pred_check_branch
              %359 = sbr.rel target = $region81
            $region80: #{mha_forward.2} parent=76 // pred_region
              // Predicated region
              $region93: #{mha_forward.2} parent=80 // pred_check
                _
              $region94: #{mha_forward.2} parent=80 // pred_check_branch
                %379 = sbr.rel (0) target = $region96
              $region95: #{mha_forward.2} parent=80 // pred_region
                %s381 = ssub.s32 2, 1
                loop: start=0, step=1, limit=1
                $region97: #{mha_forward.2} parent=95 // loop_pre_header
                  _
                $region98: #{mha_forward.2} parent=95 // loop_header
                  %s383 = sphi 0, %s387
                  %p384 = scmp.ge.s32.totalorder %s383, 1
                  %s388 = sphi %s355, %s355
                  %s389 = sphi %s354, %s354
                $region99: #{mha_forward.2} parent=95 // loop_header_branch
                  %386 = sbr.rel (%p384) target = $region103
                $region100: #{mha_forward.2} parent=95 // loop_body
                  %v390 = vld [vmem:[%s388] sm:%s381]
                  %391 = vst [vmem:[%s389] sm:%s381] %v390
                  %v392 = vld [vmem:[%s388 + $0x4] sm:%s381]
                  %393 = vst [vmem:[%s389 + $0x1] sm:%s381] %v392
                  %v394 = vld [vmem:[%s388 + $0x8] sm:%s381]
                  %395 = vst [vmem:[%s389 + $0x2] sm:%s381] %v394
                $region101: #{mha_forward.2} parent=95 // loop_footer
                  %s387 = sadd.s32 1, %s383
                $region102: #{mha_forward.2} parent=95 // loop_footer_branch
                  %382 = sbr.rel target = $region98
                $region103: #{mha_forward.2} parent=95 // loop_exit
                  _
              $region96: #{mha_forward.2} parent=80 // pred_fallthru
                _
            $region81: #{mha_forward.2} parent=76 // pred_fallthru
              _
            // Predicated region
            $region82: #{mha_forward.2} parent=76 // pred_check
              _
            $region83: #{mha_forward.2} parent=76 // pred_check_branch
              %361 = sbr.rel (0) target = $region85
            $region84: #{mha_forward.2} parent=76 // pred_region
              %s363 = ssub.s32 2, 1
              loop: start=0, step=1, limit=1
              $region86: #{mha_forward.2} parent=84 // loop_pre_header
                _
              $region87: #{mha_forward.2} parent=84 // loop_header
                %s365 = sphi 0, %s369
                %p366 = scmp.ge.s32.totalorder %s365, 1
                %s370 = sphi %s355, %s355
                %s371 = sphi %s354, %s354
              $region88: #{mha_forward.2} parent=84 // loop_header_branch
                %368 = sbr.rel (%p366) target = $region92
              $region89: #{mha_forward.2} parent=84 // loop_body
                %v372 = vld [vmem:[%s370] sm:%s363]
                %373 = vst [vmem:[%s371] sm:%s363] %v372
                %v374 = vld [vmem:[%s370 + $0x4] sm:%s363]
                %375 = vst [vmem:[%s371 + $0x1] sm:%s363] %v374
                %v376 = vld [vmem:[%s370 + $0x8] sm:%s363]
                %377 = vst [vmem:[%s371 + $0x2] sm:%s363] %v376
              $region90: #{mha_forward.2} parent=84 // loop_footer
                %s369 = sadd.s32 1, %s365
              $region91: #{mha_forward.2} parent=84 // loop_footer_branch
                %364 = sbr.rel target = $region87
              $region92: #{mha_forward.2} parent=84 // loop_exit
                _
            $region85: #{mha_forward.2} parent=76 // pred_fallthru
              _
          $region77: #{mha_forward.2} parent=72 // pred_fallthru
            _
          %396 = vnop
        $region73: #{mha_forward.2} parent=27 // pred_fallthru
          _
      $region28: #{mha_forward.2} parent=5 // pred_fallthru
        _
      %p397 = scmp.le.s32.totalorder 1, %s11
      %p398 = scmp.lt.s32.totalorder %s11, 5
      %p399 = pnand %p397, %p398
      %p400 = pneg %p399
      // Predicated region
      $region104: #{mha_forward.2} parent=5 // pred_check
        _
      $region105: #{mha_forward.2} parent=5 // pred_check_branch
        %402 = sbr.rel (%p399) target = $region107
      $region106: #{mha_forward.2} parent=5 // pred_region
        %s403 = ssub.s32 %s11, 1
        %s404 = sand.u32 %s129, 1
        %s405 = sand.u32 %s129, 1
        %s406 = smul.addr %s405, 48
        %s407 = scalar_lea.vmem [#allocation3], %s406
        // Predicated region
        $region108: #{mha_forward.2} parent=106 // pred_check
          %p408 = pneg %p142
        $region109: #{mha_forward.2} parent=106 // pred_check_branch
          %410 = sbr.rel (%p408) target = $region111
        $region110: #{mha_forward.2} parent=106 // pred_region
          _
        $region111: #{mha_forward.2} parent=106 // pred_fallthru
          _
        %s411 = sand.u32 %s155, 1
        %s412 = sand.u32 %s155, 1
        %s413 = smul.addr %s412, 3
        %s414 = scalar_lea.vmem [#allocation4], %s413
        // Predicated region
        $region112: #{mha_forward.2} parent=106 // pred_check
          %p415 = pneg %p168
        $region113: #{mha_forward.2} parent=106 // pred_check_branch
          %417 = sbr.rel (%p415) target = $region115
        $region114: #{mha_forward.2} parent=106 // pred_region
          _
        $region115: #{mha_forward.2} parent=106 // pred_fallthru
          _
        %s418 = smul.u32 2, %s21
        %p419 = scmp.lt.s32.totalorder %s418, 1
        %s420 = scalar_select %p419, %s418, 1
        %p421 = scmp.lt.s32.totalorder %s23, 0
        %s422 = scalar_select %p421, %s23, 0
        %s423 = sadd.s32 %s422, %s420
        %s424 = smul.addr %s423, 4
        %s425 = scalar_lea.vmem %s0, %s424
        %p426 = pneg %p58
        %p427 = pneg %p55
        %s428 = smul.u32 2, %s21
        %p429 = scmp.lt.s32.totalorder %s428, 1
        %s430 = scalar_select %p429, %s428, 1
        %p431 = scmp.lt.s32.totalorder %s23, 0
        %s432 = scalar_select %p431, %s23, 0
        %s433 = sadd.s32 %s432, %s430
        %s434 = smul.addr %s433, 4
        %s435 = scalar_lea.vmem %s1, %s434
        %p436 = pneg %p86
        %p437 = pneg %p83
        %s438 = smul.u32 2, %s21
        %p439 = scmp.lt.s32.totalorder %s438, 1
        %s440 = scalar_select %p439, %s438, 1
        %p441 = scmp.lt.s32.totalorder %s23, 0
        %s442 = scalar_select %p441, %s23, 0
        %s443 = sadd.s32 %s442, %s440
        %s444 = smul.addr %s443, 4
        %s445 = scalar_lea.vmem %s2, %s444
        %p446 = pneg %p114
        %p447 = pneg %p111
        %s448 = sand.u32 %s129, 1
        %s449 = sand.u32 %s129, 1
        %s450 = smul.addr %s449, 48
        %s451 = scalar_lea.vmem [#allocation3], %s450
        %p452 = pneg %p142
        %p453 = pneg %p139
        %s454 = sand.u32 %s155, 1
        %s455 = sand.u32 %s155, 1
        %s456 = smul.addr %s455, 3
        %s457 = scalar_lea.vmem [#allocation4], %s456
        %p458 = pneg %p168
        %p459 = pneg %p165
        %p460 = pneg %p196
        %p461 = pneg %p193
        %s462 = sand.u32 %s183, 1
        %s463 = sand.u32 %s183, 1
        %s464 = smul.addr %s463, 24
        %s465 = scalar_lea.vmem [#allocation5], %s464
        %s466 = smul.u32 2, %s21
        %p467 = scmp.lt.s32.totalorder %s466, 1
        %s468 = scalar_select %p467, %s466, 1
        %p469 = scmp.lt.s32.totalorder %s23, 0
        %s470 = scalar_select %p469, %s23, 0
        %s471 = sadd.s32 %s470, %s468
        %s472 = smul.addr %s471, 4
        %s473 = scalar_lea.vmem %s0, %s472
        %s474 = smul.u32 2, %s21
        %s475 = smul.u32 2, %s21
        %p476 = scmp.lt.s32.totalorder %s475, 1
        %s477 = scalar_select %p476, %s475, 1
        %p478 = scmp.lt.s32.totalorder %s23, 0
        %s479 = scalar_select %p478, %s23, 0
        %s480 = sadd.s32 %s479, %s477
        %s481 = smul.addr %s480, 4
        %s482 = scalar_lea.vmem %s1, %s481
        %s483 = smul.u32 2, %s21
        %s484 = smul.u32 2, %s21
        %p485 = scmp.lt.s32.totalorder %s484, 1
        %s486 = scalar_select %p485, %s484, 1
        %p487 = scmp.lt.s32.totalorder %s23, 0
        %s488 = scalar_select %p487, %s23, 0
        %s489 = sadd.s32 %s488, %s486
        %s490 = smul.addr %s489, 4
        %s491 = scalar_lea.vmem %s2, %s490
        %s492 = smul.u32 2, %s21
        %s493 = smul.u32 4, %s23
        %s494 = smul.u32 2, %s21
        %p496 = scmp.eq.s32.totalorder %s23, 0
        // Predicated region
        $region116: #{mha_forward.2} parent=106 // pred_check
          %p497 = pneg %p496
        $region117: #{mha_forward.2} parent=106 // pred_check_branch
          %499 = sbr.rel (%p497) target = $region119
        $region118: #{mha_forward.2} parent=106 // pred_region
          %vm500 = vcmask 64512
          %501 = vst.msk [vmem:[#allocation2] sm:$0xff] %vm500, 0.0
          %502 = vst.msk [vmem:[#allocation2 + $0x8] sm:$0xff] %vm500, 0.0
          %503 = vst.msk [vmem:[#allocation2 + $0x10] sm:$0xff] %vm500, 0.0
          %504 = vst.msk [vmem:[#allocation2 + $0x18] sm:$0xff] %vm500, 0.0
          %505 = vst.msk [vmem:[#allocation2 + $0x20] sm:$0xff] %vm500, 0.0
          %506 = vst.msk [vmem:[#allocation2 + $0x28] sm:$0xff] %vm500, 0.0
        $region119: #{mha_forward.2} parent=106 // pred_fallthru
          _
        %v507 = vld [vmem:[#allocation2] sm:$0xff]
        %v508 = vld [vmem:[#allocation2 + $0x8] sm:$0xff]
        %v509 = vld [vmem:[%s473] sm:$0xf]
        %v510 = vld [vmem:[%s473 + $0x4] sm:$0xf]
        %v511 = vld [vmem:[%s407] sm:$0xf]
        %v512 = vld [vmem:[%s407 + $0x4] sm:$0xf]
        %v513 = vld [vmem:[%s407 + $0x8] sm:$0xf]
        %v514 = vld [vmem:[%s407 + $0xc] sm:$0xf]
        %v517 = vunpack.c.l.b16 %v509
        %v518 = vunpack.c.l.b16 %v510
        %v519 = vpack.c.b16 %v518, %v517
        %v524 = vunpack.c.l.b16 %v511
        %v525 = vunpack.c.l.b16 %v512
        %v526 = vunpack.c.l.b16 %v513
        %v527 = vunpack.c.l.b16 %v514
        %v528 = vpack.c.b16 %v525, %v524
        %v529 = vpack.c.b16 %v527, %v526
        %vm532 = vcmask 261120
        %v534 = vsel %vm532, %v519, 0
        %536 = vmatprep.subr.bf16.mxu0 0
        %537 = vmatpush1.bf16.msra.mxu0 0
        %538 = vmatprep.subr.bf16.mxu0 0
        %539 = vmatpush1.bf16.msra.mxu0 0
        %540 = vmatprep.subr.bf16.mxu0 0
        %541 = vmatpush1.bf16.msra.mxu0 0
        %542 = vmatprep.subr.bf16.mxu0 0
        %543 = vmatpush1.bf16.msra.mxu0 0
        %544 = vmatprep.subr.bf16.mxu0 0
        %545 = vmatpush1.bf16.msra.mxu0 0
        %546 = vmatprep.subr.bf16.mxu0 0
        %547 = vmatpush1.bf16.msra.mxu0 0
        %548 = vmatprep.subr.bf16.mxu0 0
        %549 = vmatpush1.bf16.msra.mxu0 %v529
        %550 = vmatprep.subr.bf16.mxu0 0
        %551 = vmatpush1.bf16.msra.mxu0 %v528
        %552 = vmatprep.subr.bf16.mxu0 0
        %553 = vmatpush2.bf16.msra.mxu0 0
        %554 = vmatprep.subr.bf16.mxu0 0
        %555 = vmatpush2.bf16.msra.mxu0 0
        %556 = vmatprep.subr.bf16.mxu0 0
        %557 = vmatpush2.bf16.msra.mxu0 0
        %558 = vmatprep.subr.bf16.mxu0 0
        %559 = vmatpush2.bf16.msra.mxu0 0
        %560 = vmatprep.subr.bf16.mxu0 0
        %561 = vmatpush2.bf16.msra.mxu0 0
        %562 = vmatprep.subr.bf16.mxu0 0
        %563 = vmatpush2.bf16.msra.mxu0 0
        %564 = vmatprep.subr.bf16.mxu0 0
        %565 = vmatpush2.bf16.msra.mxu0 0
        %566 = vmatprep.subr.bf16.mxu0 0
        %567 = vmatpush2.bf16.msra.mxu0 0
        %568 = vmatprep.mubr.bf16.mxu0 0
        %569 = vmatmul.mubr.bf16.gmra.mxu0 %v534
        %v570 = vpop.f32.mrf.mxu0
        %v571 = vadd.f32 0.0, %v570
        %v572 = vpop.f32.mrf.mxu0
        %v573 = vpop.f32.mrf.mxu0
        %v574 = vadd.f32 0.0, %v573
        %v575 = vpop.f32.mrf.mxu0
        %576 = vdwg.mxu0
        %v577 = vadd.f32 %v507, %v571
        %v578 = vadd.f32 %v508, %v574
        %vm579 = vcmask 64512
        %580 = vst.msk [vmem:[#allocation2] sm:$0xff] %vm579, %v577
        %581 = vst.msk [vmem:[#allocation2 + $0x8] sm:$0xff] %vm579, %v578
        %s582 = scalar_lea.vmem [#allocation2], 16
        %v583 = vld [vmem:[%s582] sm:$0xff]
        %v584 = vld [vmem:[%s582 + $0x8] sm:$0xff]
        %v585 = vld [vmem:[%s482] sm:$0xf]
        %v586 = vld [vmem:[%s482 + $0x4] sm:$0xf]
        %s587 = scalar_lea.vmem %s407, 16 [#allocation3]
        %v588 = vld [vmem:[%s587] sm:$0xf]
        %v589 = vld [vmem:[%s587 + $0x4] sm:$0xf]
        %v590 = vld [vmem:[%s587 + $0x8] sm:$0xf]
        %v591 = vld [vmem:[%s587 + $0xc] sm:$0xf]
        %v594 = vunpack.c.l.b16 %v585
        %v595 = vunpack.c.l.b16 %v586
        %v596 = vpack.c.b16 %v595, %v594
        %v601 = vunpack.c.l.b16 %v588
        %v602 = vunpack.c.l.b16 %v589
        %v603 = vunpack.c.l.b16 %v590
        %v604 = vunpack.c.l.b16 %v591
        %v605 = vpack.c.b16 %v602, %v601
        %v606 = vpack.c.b16 %v604, %v603
        %v610 = vsel %vm532, %v596, 0
        %612 = vmatprep.subr.bf16.mxu0 0
        %613 = vmatpush1.bf16.msra.mxu0 0
        %614 = vmatprep.subr.bf16.mxu0 0
        %615 = vmatpush1.bf16.msra.mxu0 0
        %616 = vmatprep.subr.bf16.mxu0 0
        %617 = vmatpush1.bf16.msra.mxu0 0
        %618 = vmatprep.subr.bf16.mxu0 0
        %619 = vmatpush1.bf16.msra.mxu0 0
        %620 = vmatprep.subr.bf16.mxu0 0
        %621 = vmatpush1.bf16.msra.mxu0 0
        %622 = vmatprep.subr.bf16.mxu0 0
        %623 = vmatpush1.bf16.msra.mxu0 0
        %624 = vmatprep.subr.bf16.mxu0 0
        %625 = vmatpush1.bf16.msra.mxu0 %v606
        %626 = vmatprep.subr.bf16.mxu0 0
        %627 = vmatpush1.bf16.msra.mxu0 %v605
        %628 = vmatprep.subr.bf16.mxu0 0
        %629 = vmatpush2.bf16.msra.mxu0 0
        %630 = vmatprep.subr.bf16.mxu0 0
        %631 = vmatpush2.bf16.msra.mxu0 0
        %632 = vmatprep.subr.bf16.mxu0 0
        %633 = vmatpush2.bf16.msra.mxu0 0
        %634 = vmatprep.subr.bf16.mxu0 0
        %635 = vmatpush2.bf16.msra.mxu0 0
        %636 = vmatprep.subr.bf16.mxu0 0
        %637 = vmatpush2.bf16.msra.mxu0 0
        %638 = vmatprep.subr.bf16.mxu0 0
        %639 = vmatpush2.bf16.msra.mxu0 0
        %640 = vmatprep.subr.bf16.mxu0 0
        %641 = vmatpush2.bf16.msra.mxu0 0
        %642 = vmatprep.subr.bf16.mxu0 0
        %643 = vmatpush2.bf16.msra.mxu0 0
        %644 = vmatprep.mubr.bf16.mxu0 0
        %645 = vmatmul.mubr.bf16.gmra.mxu0 %v610
        %v646 = vpop.f32.mrf.mxu0
        %v647 = vadd.f32 0.0, %v646
        %v648 = vpop.f32.mrf.mxu0
        %v649 = vpop.f32.mrf.mxu0
        %v650 = vadd.f32 0.0, %v649
        %v651 = vpop.f32.mrf.mxu0
        %652 = vdwg.mxu0
        %v653 = vadd.f32 %v583, %v647
        %v654 = vadd.f32 %v584, %v650
        %655 = vst.msk [vmem:[%s582] sm:$0xff] %vm579, %v653
        %656 = vst.msk [vmem:[%s582 + $0x8] sm:$0xff] %vm579, %v654
        %s657 = scalar_lea.vmem [#allocation2], 32
        %v658 = vld [vmem:[%s657] sm:$0xff]
        %v659 = vld [vmem:[%s657 + $0x8] sm:$0xff]
        %v660 = vld [vmem:[%s491] sm:$0xf]
        %v661 = vld [vmem:[%s491 + $0x4] sm:$0xf]
        %s662 = scalar_lea.vmem %s407, 32 [#allocation3]
        %v663 = vld [vmem:[%s662] sm:$0xf]
        %v664 = vld [vmem:[%s662 + $0x4] sm:$0xf]
        %v665 = vld [vmem:[%s662 + $0x8] sm:$0xf]
        %v666 = vld [vmem:[%s662 + $0xc] sm:$0xf]
        %v669 = vunpack.c.l.b16 %v660
        %v670 = vunpack.c.l.b16 %v661
        %v671 = vpack.c.b16 %v670, %v669
        %v676 = vunpack.c.l.b16 %v663
        %v677 = vunpack.c.l.b16 %v664
        %v678 = vunpack.c.l.b16 %v665
        %v679 = vunpack.c.l.b16 %v666
        %v680 = vpack.c.b16 %v677, %v676
        %v681 = vpack.c.b16 %v679, %v678
        %v685 = vsel %vm532, %v671, 0
        %687 = vmatprep.subr.bf16.mxu0 0
        %688 = vmatpush1.bf16.msra.mxu0 0
        %689 = vmatprep.subr.bf16.mxu0 0
        %690 = vmatpush1.bf16.msra.mxu0 0
        %691 = vmatprep.subr.bf16.mxu0 0
        %692 = vmatpush1.bf16.msra.mxu0 0
        %693 = vmatprep.subr.bf16.mxu0 0
        %694 = vmatpush1.bf16.msra.mxu0 0
        %695 = vmatprep.subr.bf16.mxu0 0
        %696 = vmatpush1.bf16.msra.mxu0 0
        %697 = vmatprep.subr.bf16.mxu0 0
        %698 = vmatpush1.bf16.msra.mxu0 0
        %699 = vmatprep.subr.bf16.mxu0 0
        %700 = vmatpush1.bf16.msra.mxu0 %v681
        %701 = vmatprep.subr.bf16.mxu0 0
        %702 = vmatpush1.bf16.msra.mxu0 %v680
        %703 = vmatprep.subr.bf16.mxu0 0
        %704 = vmatpush2.bf16.msra.mxu0 0
        %705 = vmatprep.subr.bf16.mxu0 0
        %706 = vmatpush2.bf16.msra.mxu0 0
        %707 = vmatprep.subr.bf16.mxu0 0
        %708 = vmatpush2.bf16.msra.mxu0 0
        %709 = vmatprep.subr.bf16.mxu0 0
        %710 = vmatpush2.bf16.msra.mxu0 0
        %711 = vmatprep.subr.bf16.mxu0 0
        %712 = vmatpush2.bf16.msra.mxu0 0
        %713 = vmatprep.subr.bf16.mxu0 0
        %714 = vmatpush2.bf16.msra.mxu0 0
        %715 = vmatprep.subr.bf16.mxu0 0
        %716 = vmatpush2.bf16.msra.mxu0 0
        %717 = vmatprep.subr.bf16.mxu0 0
        %718 = vmatpush2.bf16.msra.mxu0 0
        %719 = vmatprep.mubr.bf16.mxu0 0
        %720 = vmatmul.mubr.bf16.gmra.mxu0 %v685
        %v721 = vpop.f32.mrf.mxu0
        %v722 = vadd.f32 0.0, %v721
        %v723 = vpop.f32.mrf.mxu0
        %v724 = vpop.f32.mrf.mxu0
        %v725 = vadd.f32 0.0, %v724
        %v726 = vpop.f32.mrf.mxu0
        %727 = vdwg.mxu0
        %v728 = vadd.f32 %v658, %v722
        %v729 = vadd.f32 %v659, %v725
        %730 = vst.msk [vmem:[%s657] sm:$0xff] %vm579, %v728
        %731 = vst.msk [vmem:[%s657 + $0x8] sm:$0xff] %vm579, %v729
        // Predicated region
        $region120: #{mha_forward.2} parent=106 // pred_check
          %p732 = pneg %p496
        $region121: #{mha_forward.2} parent=106 // pred_check_branch
          %734 = sbr.rel (%p732) target = $region123
        $region122: #{mha_forward.2} parent=106 // pred_region
          %v735 = vld [vmem:[#allocation2] sm:$0xff]
          %v736 = vld [vmem:[#allocation2 + $0x8] sm:$0xff]
          %v737 = vld [vmem:[#allocation2 + $0x10] sm:$0xff]
          %v738 = vld [vmem:[#allocation2 + $0x18] sm:$0xff]
          %v739 = vld [vmem:[#allocation2 + $0x20] sm:$0xff]
          %v740 = vld [vmem:[#allocation2 + $0x28] sm:$0xff]
          %v741 = vld [vmem:[%s414] sm:$0x1]
          %v742 = vld [vmem:[%s414 + $0x1] sm:$0x1]
          %v743 = vld [vmem:[%s414 + $0x2] sm:$0x1]
          %v747 = vlaneseq
          %v748 = vshrl.u32 %v747, 7
          %v749 = vsub.s32 0, %v748
          %v750 = vrot.slane %v741, %v749
          %v751 = vlaneseq
          %v752 = vshrl.u32 %v751, 7
          %v753 = vsub.s32 0, %v752
          %v754 = vrot.slane %v742, %v753
          %v755 = vlaneseq
          %v756 = vshrl.u32 %v755, 7
          %v757 = vsub.s32 0, %v756
          %v758 = vrot.slane %v743, %v757
          %v762 = vadd.f32 %v735, %v750
          %v763 = vadd.f32 %v736, %v750
          %v764 = vadd.f32 %v737, %v754
          %v765 = vadd.f32 %v738, %v754
          %v766 = vadd.f32 %v739, %v758
          %v767 = vadd.f32 %v740, %v758
          %v768 = vpack.c.bf16 %v763, %v762
          %v769 = vpack.c.bf16 %v765, %v764
          %v770 = vpack.c.bf16 %v767, %v766
          %v774 = vunpack.c.l.b16 %v768
          %v775 = vunpack.c.h.b16 %v768
          %v776 = vunpack.c.l.b16 %v769
          %v777 = vunpack.c.h.b16 %v769
          %v778 = vunpack.c.l.b16 %v770
          %v779 = vunpack.c.h.b16 %v770
          %v780 = vpack.c.b16 %v774, %v774
          %v781 = vpack.c.b16 %v775, %v775
          %v782 = vpack.c.b16 %v776, %v776
          %v783 = vpack.c.b16 %v777, %v777
          %v784 = vpack.c.b16 %v778, %v778
          %v785 = vpack.c.b16 %v779, %v779
          %vm792 = vcmask 60416
          %793 = vst.msk [vmem:[%s465] sm:$0xf] %vm792, %v780
          %794 = vst.msk [vmem:[%s465 + $0x4] sm:$0xf] %vm792, %v781
          %795 = vst.msk [vmem:[%s465 + $0x8] sm:$0xf] %vm792, %v782
          %796 = vst.msk [vmem:[%s465 + $0xc] sm:$0xf] %vm792, %v783
          %797 = vst.msk [vmem:[%s465 + $0x10] sm:$0xf] %vm792, %v784
          %798 = vst.msk [vmem:[%s465 + $0x14] sm:$0xf] %vm792, %v785
        $region123: #{mha_forward.2} parent=106 // pred_fallthru
          _
        %s799 = sand.u32 %s183, 1
        %s800 = sand.u32 %s183, 1
        %s801 = smul.addr %s800, 24
        %s802 = scalar_lea.vmem [#allocation5], %s801
        // Predicated region
        $region124: #{mha_forward.2} parent=106 // pred_check
          %p803 = pneg %p193
        $region125: #{mha_forward.2} parent=106 // pred_check_branch
          %805 = sbr.rel (%p803) target = $region127
        $region126: #{mha_forward.2} parent=106 // pred_region
          %s806 = smul.u32 2, %s21
          %s807 = smul.addr %s22, 2
          %s808 = sadd.s32 %s806, %s807
          %s809 = smul.addr %s808, 4
          %s810 = scalar_lea.vmem %s5, %s809
          // Predicated region
          $region128: #{mha_forward.2} parent=126 // pred_check
            _
          $region129: #{mha_forward.2} parent=126 // pred_check_branch
            %812 = sbr.rel (0) target = $region131
          $region130: #{mha_forward.2} parent=126 // pred_region
            // Predicated region
            $region132: #{mha_forward.2} parent=130 // pred_check
              _
            $region133: #{mha_forward.2} parent=130 // pred_check_branch
              %814 = sbr.rel target = $region135
            $region134: #{mha_forward.2} parent=130 // pred_region
              // Predicated region
              $region147: #{mha_forward.2} parent=134 // pred_check
                _
              $region148: #{mha_forward.2} parent=134 // pred_check_branch
                %840 = sbr.rel (0) target = $region150
              $region149: #{mha_forward.2} parent=134 // pred_region
                loop: start=0, step=1, limit=1
                $region151: #{mha_forward.2} parent=149 // loop_pre_header
                  _
                $region152: #{mha_forward.2} parent=149 // loop_header
                  %s842 = sphi 0, %s846
                  %p843 = scmp.ge.s32.totalorder %s842, 1
                  %s847 = sphi %s802, %s802
                  %s848 = sphi %s810, %s810
                $region153: #{mha_forward.2} parent=149 // loop_header_branch
                  %845 = sbr.rel (%p843) target = $region157
                $region154: #{mha_forward.2} parent=149 // loop_body
                  _
                $region155: #{mha_forward.2} parent=149 // loop_footer
                  %s846 = sadd.s32 1, %s842
                $region156: #{mha_forward.2} parent=149 // loop_footer_branch
                  %841 = sbr.rel target = $region152
                $region157: #{mha_forward.2} parent=149 // loop_exit
                  _
                %s850 = ssub.s32 16, 1
                loop: start=0, step=1, limit=1
                $region158: #{mha_forward.2} parent=149 // loop_pre_header
                  _
                $region159: #{mha_forward.2} parent=149 // loop_header
                  %s852 = sphi 0, %s856
                  %p853 = scmp.ge.s32.totalorder %s852, 1
                  %s857 = sphi %s802, %s802
                  %s858 = sphi %s810, %s810
                $region160: #{mha_forward.2} parent=149 // loop_header_branch
                  %855 = sbr.rel (%p853) target = $region164
                $region161: #{mha_forward.2} parent=149 // loop_body
                  %v859 = vld [vmem:[%s857] sm:%s850]
                  %860 = vst [vmem:[%s858] sm:%s850] %v859
                  %v861 = vld [vmem:[%s857 + $0x4] sm:%s850]
                  %862 = vst [vmem:[%s858 + $0x4] sm:%s850] %v861
                  %v863 = vld [vmem:[%s857 + $0x8] sm:%s850]
                  %864 = vst [vmem:[%s858 + $0x20] sm:%s850] %v863
                  %v865 = vld [vmem:[%s857 + $0xc] sm:%s850]
                  %866 = vst [vmem:[%s858 + $0x24] sm:%s850] %v865
                  %v867 = vld [vmem:[%s857 + $0x10] sm:%s850]
                  %868 = vst [vmem:[%s858 + $0x40] sm:%s850] %v867
                  %v869 = vld [vmem:[%s857 + $0x14] sm:%s850]
                  %870 = vst [vmem:[%s858 + $0x44] sm:%s850] %v869
                $region162: #{mha_forward.2} parent=149 // loop_footer
                  %s856 = sadd.s32 1, %s852
                $region163: #{mha_forward.2} parent=149 // loop_footer_branch
                  %851 = sbr.rel target = $region159
                $region164: #{mha_forward.2} parent=149 // loop_exit
                  _
              $region150: #{mha_forward.2} parent=134 // pred_fallthru
                _
            $region135: #{mha_forward.2} parent=130 // pred_fallthru
              _
            // Predicated region
            $region136: #{mha_forward.2} parent=130 // pred_check
              _
            $region137: #{mha_forward.2} parent=130 // pred_check_branch
              %816 = sbr.rel (0) target = $region139
            $region138: #{mha_forward.2} parent=130 // pred_region
              %s818 = ssub.s32 16, 1
              loop: start=0, step=1, limit=1
              $region140: #{mha_forward.2} parent=138 // loop_pre_header
                _
              $region141: #{mha_forward.2} parent=138 // loop_header
                %s820 = sphi 0, %s824
                %p821 = scmp.ge.s32.totalorder %s820, 1
                %s825 = sphi %s802, %s802
                %s826 = sphi %s810, %s810
              $region142: #{mha_forward.2} parent=138 // loop_header_branch
                %823 = sbr.rel (%p821) target = $region146
              $region143: #{mha_forward.2} parent=138 // loop_body
                %v827 = vld [vmem:[%s825] sm:%s818]
                %828 = vst [vmem:[%s826] sm:%s818] %v827
                %v829 = vld [vmem:[%s825 + $0x4] sm:%s818]
                %830 = vst [vmem:[%s826 + $0x4] sm:%s818] %v829
                %v831 = vld [vmem:[%s825 + $0x8] sm:%s818]
                %832 = vst [vmem:[%s826 + $0x20] sm:%s818] %v831
                %v833 = vld [vmem:[%s825 + $0xc] sm:%s818]
                %834 = vst [vmem:[%s826 + $0x24] sm:%s818] %v833
                %v835 = vld [vmem:[%s825 + $0x10] sm:%s818]
                %836 = vst [vmem:[%s826 + $0x40] sm:%s818] %v835
                %v837 = vld [vmem:[%s825 + $0x14] sm:%s818]
                %838 = vst [vmem:[%s826 + $0x44] sm:%s818] %v837
              $region144: #{mha_forward.2} parent=138 // loop_footer
                %s824 = sadd.s32 1, %s820
              $region145: #{mha_forward.2} parent=138 // loop_footer_branch
                %819 = sbr.rel target = $region141
              $region146: #{mha_forward.2} parent=138 // loop_exit
                _
            $region139: #{mha_forward.2} parent=130 // pred_fallthru
              _
          $region131: #{mha_forward.2} parent=126 // pred_fallthru
            _
          %871 = vnop
        $region127: #{mha_forward.2} parent=106 // pred_fallthru
          _
      $region107: #{mha_forward.2} parent=5 // pred_fallthru
        _
      %p872 = scmp.le.s32.totalorder 2, %s11
      // Predicated region
      $region165: #{mha_forward.2} parent=5 // pred_check
        %p873 = pneg %p872
      $region166: #{mha_forward.2} parent=5 // pred_check_branch
        %875 = sbr.rel (%p873) target = $region168
      $region167: #{mha_forward.2} parent=5 // pred_region
        %s876 = ssub.s32 %s11, 2
        // Predicated region
        $region169: #{mha_forward.2} parent=167 // pred_check
          %p877 = pneg %p199
        $region170: #{mha_forward.2} parent=167 // pred_check_branch
          %879 = sbr.rel (%p877) target = $region172
        $region171: #{mha_forward.2} parent=167 // pred_region
          %s880 = sand.u32 %s184, 1
          %s881 = sand.u32 %s184, 1
          %s882 = smul.addr %s881, 24
          %s883 = scalar_lea.vmem [#allocation5], %s882
        $region172: #{mha_forward.2} parent=167 // pred_fallthru
          _
      $region168: #{mha_forward.2} parent=5 // pred_fallthru
        _
    $region6: #{mha_forward.2} parent=1 // loop_footer
      %s15 = sadd.s32 1, %s11
    $region7: #{mha_forward.2} parent=1 // loop_footer_branch
      %10 = sbr.rel target = $region3
    $region8: #{mha_forward.2} parent=1 // loop_exit
      _

// kernel: mha_forward.3
$region0: #{mha_forward.3}
  #allocation0 [shape = 'u32[]', space=smem, size = 0x4, offset = 0x4, fixed_abs, tag = 'smem constant byte address 0x4 - core index']
  #allocation1 [shape = 'u32[144,128]{1,0:T(1,128)}', space=vmem, size = 0x12000, scoped, tag = 'internal scratch']
  #allocation2 [shape = 'f32[4,8,1]{2,1,0:T(8,128)}', space=vmem, size = 0x4000, scoped, tag = 'scratch operand']
  #allocation3 [shape = 'f32[4,8,1]{2,1,0:T(8,128)}', space=vmem, size = 0x4000, scoped, tag = 'scratch operand']
  #allocation4 [shape = 'f32[4,8,8]{2,1,0:T(8,128)}', space=vmem, size = 0x4000, scoped, tag = 'scratch operand']
  #allocation5 [shape = 'bf16[8,32]{1,0:T(8,128)(2,1)}', space=vmem, size = 0x800, scoped, tag = 'scratch operand']
  #allocation6 [shape = 's32[1]{0}', space=sflag, size = 0x4, scoped, tag = 'scoped memory for mha_forward.3']
  #allocation7 [shape = 'u8[1024]{0}', space=smem, size = 0x400, scoped, tag = 'prefetched SMEM operand 0']
  %s0 = inlined_call_operand.vmem [shape: s32[2,1], index: 0, kind: input, shape index: {}]
  %s1 = inlined_call_operand.vmem [shape: bf16[3,4,2,8,8], index: 1, kind: input, shape index: {}, may-alias: {1,2,3}]
  %s2 = inlined_call_operand.vmem [shape: bf16[3,4,2,8,8], index: 2, kind: input, shape index: {}, may-alias: {1,2,3}]
  %s3 = inlined_call_operand.vmem [shape: bf16[3,4,2,8,8], index: 3, kind: input, shape index: {}, may-alias: {1,2,3}]
  %s4 = inlined_call_operand.vmem [shape: bf16[2,1,8,8], index: 4, kind: input, shape index: {}]
  %s5 = inlined_call_operand.vmem [shape: bf16[32,32], index: 5, kind: input, shape index: {}]
  %s6 = inlined_call_operand.vmem [shape: f32[1,32], index: 6, kind: input, shape index: {}]
  %s7 = inlined_call_operand.hbm [shape: f32[2,8,32], index: 7, kind: output, shape index: {}]
  %s8 = sld [smem:[#allocation0]]
  $region192: #{mha_forward.3} parent=0
    _
  %s10 = ssub.s32 1, %s8
  %s11 = scalar_select 0, %s10, %s8
  %s12 = sshll.u32 %s0, 4
  %s13 = int_to_ptr.vmem [resolvable:$true] %s12
  %15 = dma.vmem_to_smem %s13, 32, [#allocation7], [#allocation6]
  %16 = dma.done [#allocation6], 32
  %17 = sfence
  $region1: #{mha_forward.3} parent=0
    #allocation8 [shape = 'u8[16384]{0}', space=vmem, size = 0x4000, scoped, tag = 'input window, operand 1']
    #allocation9 [shape = 'u8[16384]{0}', space=vmem, size = 0x4000, scoped, tag = 'input window, operand 2']
    #allocation10 [shape = 'u8[16384]{0}', space=vmem, size = 0x4000, scoped, tag = 'input window, operand 3']
    #allocation11 [shape = 'u8[8192]{0}', space=vmem, size = 0x2000, scoped, tag = 'output window, operand 0']
    #allocation12 [shape = 's32[2]{0}', space=sflag, size = 0x8, scoped, tag = 'scoped memory for mha_forward.3']
    %18 = vsyncpa [#allocation12], 0
    %s19 = scalar_lea.sflag [#allocation12], 1
    %20 = vsyncpa %s19, 0
    loop: start=0, step=1, limit=4
    $region2: #{mha_forward.3} parent=1 // loop_pre_header
      _
    $region3: #{mha_forward.3} parent=1 // loop_header
      %s22 = sphi 0, %s26
      %p23 = scmp.ge.s32.totalorder %s22, 4
      %s29 = sphi 0, %s48
      %s30 = sphi 0, %s44
      %s31 = sphi 0, %s40
      %s32 = sphi 0, %s29
      %s33 = sphi 0, %s30
      %s34 = sphi 0, %s31
      %s35 = sphi 0, %s32
      %s36 = sphi 0, %s33
      %s37 = sphi 0, %s34
      %s53 = sphi 0, %s55
      %s56 = sphi 0, %s53
      %s57 = sphi 0, %s56
      %s73 = sphi 0, %s57
      %s81 = sphi 0, %s83
      %s84 = sphi 0, %s81
      %s85 = sphi 0, %s84
      %s101 = sphi 0, %s85
      %s109 = sphi 0, %s111
      %s112 = sphi 0, %s109
      %s113 = sphi 0, %s112
      %s129 = sphi 0, %s113
      %s139 = sphi 0, %s141
      %s142 = sphi 0, %s139
      %s143 = sphi 0, %s142
      %s159 = sphi 0, %s143
      %s163 = sphi 0, %s163
      %s165 = sphi 0, %s163
      %s166 = sphi 0, %s165
      %s180 = sphi 0, %s166
      %s184 = sphi 0, %s184
      %s186 = sphi 0, %s184
      %s187 = sphi 0, %s186
      %s201 = sphi 0, %s187
      %s209 = sphi 0, %s211
      %s212 = sphi 0, %s209
      %s213 = sphi 0, %s212
      %s229 = sphi 0, %s213
    $region4: #{mha_forward.3} parent=1 // loop_header_branch
      %25 = sbr.rel (%p23) target = $region8
    $region5: #{mha_forward.3} parent=1 // loop_body
      %s27 = ssub.s32 %s22, 1
      %s28 = ssub.s32 %s22, 2
      %s38 = sadd.s32 1, %s31
      %p39 = scmp.ge.s32.totalorder %s38, 1
      %s40 = scalar_select %p39, 0, %s38
      %s41 = sadd.s32 1, %s30
      %s42 = scalar_select %p39, %s41, %s30
      %p43 = scmp.ge.s32.totalorder %s42, 1
      %s44 = scalar_select %p43, 0, %s42
      %s45 = sadd.s32 1, %s29
      %s46 = scalar_select %p43, %s45, %s29
      %p47 = scmp.ge.s32.totalorder %s46, 2
      %s48 = scalar_select %p47, 0, %s46
      %s49 = ssub.s32 %s29, %s48
      %s50 = ssub.s32 %s30, %s44
      %s51 = sor.u32 %s49, %s50
      %p52 = scmp.eq.s32.totalorder %s51, 0
      %s54 = sadd.s32 %s53, 1
      %s55 = scalar_select %p52, %s53, %s54
      %p58 = pneg %p52
      %p59 = scmp.eq.s32.totalorder %s22, 1
      %p60 = por %p58, %p59
      %p61 = scmp.ne.s32.totalorder %s53, %s56
      %p62 = scmp.eq.s32.totalorder %s22, 0
      %p63 = por %p61, %p62
      %p64 = scmp.ne.s32.totalorder %s53, %s56
      %p65 = scmp.eq.s32.totalorder %s27, 1
      %p66 = por %p64, %p65
      %p67 = scmp.ne.s32.totalorder %s56, %s57
      %p68 = scmp.eq.s32.totalorder %s27, 0
      %p69 = por %p67, %p68
      %p70 = scmp.ne.s32.totalorder %s56, %s57
      %p71 = scmp.eq.s32.totalorder %s28, 1
      %p72 = por %p70, %p71
      %p74 = scmp.ne.s32.totalorder %s57, %s73
      %p75 = scmp.eq.s32.totalorder %s28, 0
      %p76 = por %p74, %p75
      %s77 = ssub.s32 %s29, %s48
      %s78 = ssub.s32 %s31, %s40
      %s79 = sor.u32 %s77, %s78
      %p80 = scmp.eq.s32.totalorder %s79, 0
      %s82 = sadd.s32 %s81, 1
      %s83 = scalar_select %p80, %s81, %s82
      %p86 = pneg %p80
      %p87 = scmp.eq.s32.totalorder %s22, 1
      %p88 = por %p86, %p87
      %p89 = scmp.ne.s32.totalorder %s81, %s84
      %p90 = scmp.eq.s32.totalorder %s22, 0
      %p91 = por %p89, %p90
      %p92 = scmp.ne.s32.totalorder %s81, %s84
      %p93 = scmp.eq.s32.totalorder %s27, 1
      %p94 = por %p92, %p93
      %p95 = scmp.ne.s32.totalorder %s84, %s85
      %p96 = scmp.eq.s32.totalorder %s27, 0
      %p97 = por %p95, %p96
      %p98 = scmp.ne.s32.totalorder %s84, %s85
      %p99 = scmp.eq.s32.totalorder %s28, 1
      %p100 = por %p98, %p99
      %p102 = scmp.ne.s32.totalorder %s85, %s101
      %p103 = scmp.eq.s32.totalorder %s28, 0
      %p104 = por %p102, %p103
      %s105 = ssub.s32 %s29, %s48
      %s106 = ssub.s32 %s31, %s40
      %s107 = sor.u32 %s105, %s106
      %p108 = scmp.eq.s32.totalorder %s107, 0
      %s110 = sadd.s32 %s109, 1
      %s111 = scalar_select %p108, %s109, %s110
      %p114 = pneg %p108
      %p115 = scmp.eq.s32.totalorder %s22, 1
      %p116 = por %p114, %p115
      %p117 = scmp.ne.s32.totalorder %s109, %s112
      %p118 = scmp.eq.s32.totalorder %s22, 0
      %p119 = por %p117, %p118
      %p120 = scmp.ne.s32.totalorder %s109, %s112
      %p121 = scmp.eq.s32.totalorder %s27, 1
      %p122 = por %p120, %p121
      %p123 = scmp.ne.s32.totalorder %s112, %s113
      %p124 = scmp.eq.s32.totalorder %s27, 0
      %p125 = por %p123, %p124
      %p126 = scmp.ne.s32.totalorder %s112, %s113
      %p127 = scmp.eq.s32.totalorder %s28, 1
      %p128 = por %p126, %p127
      %p130 = scmp.ne.s32.totalorder %s113, %s129
      %p131 = scmp.eq.s32.totalorder %s28, 0
      %p132 = por %p130, %p131
      %s133 = ssub.s32 %s29, %s48
      %s134 = ssub.s32 %s30, %s44
      %s135 = sor.u32 %s133, %s134
      %s136 = ssub.s32 %s31, %s40
      %s137 = sor.u32 %s135, %s136
      %p138 = scmp.eq.s32.totalorder %s137, 0
      %s140 = sadd.s32 %s139, 1
      %s141 = scalar_select %p138, %s139, %s140
      %p144 = pneg %p138
      %p145 = scmp.eq.s32.totalorder %s22, 1
      %p146 = por %p144, %p145
      %p147 = scmp.ne.s32.totalorder %s139, %s142
      %p148 = scmp.eq.s32.totalorder %s22, 0
      %p149 = por %p147, %p148
      %p150 = scmp.ne.s32.totalorder %s139, %s142
      %p151 = scmp.eq.s32.totalorder %s27, 1
      %p152 = por %p150, %p151
      %p153 = scmp.ne.s32.totalorder %s142, %s143
      %p154 = scmp.eq.s32.totalorder %s27, 0
      %p155 = por %p153, %p154
      %p156 = scmp.ne.s32.totalorder %s142, %s143
      %p157 = scmp.eq.s32.totalorder %s28, 1
      %p158 = por %p156, %p157
      %p160 = scmp.ne.s32.totalorder %s143, %s159
      %p161 = scmp.eq.s32.totalorder %s28, 0
      %p162 = por %p160, %p161
      %s164 = sadd.s32 %s163, 1
      %p167 = scmp.eq.s32.totalorder %s22, 1
      %p168 = scmp.ne.s32.totalorder %s163, %s165
      %p169 = scmp.eq.s32.totalorder %s22, 0
      %p170 = por %p168, %p169
      %p171 = scmp.ne.s32.totalorder %s163, %s165
      %p172 = scmp.eq.s32.totalorder %s27, 1
      %p173 = por %p171, %p172
      %p174 = scmp.ne.s32.totalorder %s165, %s166
      %p175 = scmp.eq.s32.totalorder %s27, 0
      %p176 = por %p174, %p175
      %p177 = scmp.ne.s32.totalorder %s165, %s166
      %p178 = scmp.eq.s32.totalorder %s28, 1
      %p179 = por %p177, %p178
      %p181 = scmp.ne.s32.totalorder %s166, %s180
      %p182 = scmp.eq.s32.totalorder %s28, 0
      %p183 = por %p181, %p182
      %s185 = sadd.s32 %s184, 1
      %p188 = scmp.eq.s32.totalorder %s22, 1
      %p189 = scmp.ne.s32.totalorder %s184, %s186
      %p190 = scmp.eq.s32.totalorder %s22, 0
      %p191 = por %p189, %p190
      %p192 = scmp.ne.s32.totalorder %s184, %s186
      %p193 = scmp.eq.s32.totalorder %s27, 1
      %p194 = por %p192, %p193
      %p195 = scmp.ne.s32.totalorder %s186, %s187
      %p196 = scmp.eq.s32.totalorder %s27, 0
      %p197 = por %p195, %p196
      %p198 = scmp.ne.s32.totalorder %s186, %s187
      %p199 = scmp.eq.s32.totalorder %s28, 1
      %p200 = por %p198, %p199
      %p202 = scmp.ne.s32.totalorder %s187, %s201
      %p203 = scmp.eq.s32.totalorder %s28, 0
      %p204 = por %p202, %p203
      %s205 = ssub.s32 %s29, %s48
      %s206 = ssub.s32 %s30, %s44
      %s207 = sor.u32 %s205, %s206
      %p208 = scmp.eq.s32.totalorder %s207, 0
      %s210 = sadd.s32 %s209, 1
      %s211 = scalar_select %p208, %s209, %s210
      %p214 = pneg %p208
      %p215 = scmp.eq.s32.totalorder %s22, 1
      %p216 = por %p214, %p215
      %p217 = scmp.ne.s32.totalorder %s209, %s212
      %p218 = scmp.eq.s32.totalorder %s22, 0
      %p219 = por %p217, %p218
      %p220 = scmp.ne.s32.totalorder %s209, %s212
      %p221 = scmp.eq.s32.totalorder %s27, 1
      %p222 = por %p220, %p221
      %p223 = scmp.ne.s32.totalorder %s212, %s213
      %p224 = scmp.eq.s32.totalorder %s27, 0
      %p225 = por %p223, %p224
      %p226 = scmp.ne.s32.totalorder %s212, %s213
      %p227 = scmp.eq.s32.totalorder %s28, 1
      %p228 = por %p226, %p227
      %p230 = scmp.ne.s32.totalorder %s213, %s229
      %p231 = scmp.eq.s32.totalorder %s28, 0
      %p232 = por %p230, %p231
      %p233 = scmp.le.s32.totalorder 1, %s22
      %p234 = scmp.lt.s32.totalorder %s22, 3
      %p235 = pnand %p233, %p234
      %p236 = pneg %p235
      // Predicated region
      $region9: #{mha_forward.3} parent=5 // pred_check
        _
      $region10: #{mha_forward.3} parent=5 // pred_check_branch
        %238 = sbr.rel (%p235) target = $region12
      $region11: #{mha_forward.3} parent=5 // pred_region
        %s239 = ssub.s32 %s22, 1
        // Predicated region
        $region13: #{mha_forward.3} parent=11 // pred_check
          %p240 = pneg %p176
        $region14: #{mha_forward.3} parent=11 // pred_check_branch
          %242 = sbr.rel (%p240) target = $region16
        $region15: #{mha_forward.3} parent=11 // pred_region
          _
        $region16: #{mha_forward.3} parent=11 // pred_fallthru
          _
        // Predicated region
        $region17: #{mha_forward.3} parent=11 // pred_check
          %p243 = pneg %p197
        $region18: #{mha_forward.3} parent=11 // pred_check_branch
          %245 = sbr.rel (%p243) target = $region20
        $region19: #{mha_forward.3} parent=11 // pred_region
          _
        $region20: #{mha_forward.3} parent=11 // pred_fallthru
          _
      $region12: #{mha_forward.3} parent=5 // pred_fallthru
        _
      %p246 = scmp.lt.s32.totalorder %s22, 2
      // Predicated region
      $region21: #{mha_forward.3} parent=5 // pred_check
        %p247 = pneg %p246
      $region22: #{mha_forward.3} parent=5 // pred_check_branch
        %249 = sbr.rel (%p247) target = $region24
      $region23: #{mha_forward.3} parent=5 // pred_region
        // Predicated region
        $region25: #{mha_forward.3} parent=23 // pred_check
          %p250 = pneg %p63
        $region26: #{mha_forward.3} parent=23 // pred_check_branch
          %252 = sbr.rel (%p250) target = $region28
        $region27: #{mha_forward.3} parent=23 // pred_region
          %s253 = sand.u32 %s53, 1
          %s254 = sand.u32 %s53, 1
          %s255 = smul.addr %s254, 16
          %s256 = scalar_lea.vmem [#allocation8], %s255
          %s257 = sadd.s32 %s30, %s29
          %s258 = smul.addr %s257, 4
          %s259 = scalar_lea.vmem %s1, %s258
          // Predicated region
          $region29: #{mha_forward.3} parent=27 // pred_check
            _
          $region30: #{mha_forward.3} parent=27 // pred_check_branch
            %261 = sbr.rel (0) target = $region32
          $region31: #{mha_forward.3} parent=27 // pred_region
            // Predicated region
            $region33: #{mha_forward.3} parent=31 // pred_check
              _
            $region34: #{mha_forward.3} parent=31 // pred_check_branch
              %263 = sbr.rel target = $region36
            $region35: #{mha_forward.3} parent=31 // pred_region
              // Predicated region
              $region48: #{mha_forward.3} parent=35 // pred_check
                _
              $region49: #{mha_forward.3} parent=35 // pred_check_branch
                %285 = sbr.rel (0) target = $region51
              $region50: #{mha_forward.3} parent=35 // pred_region
                loop: start=0, step=1, limit=1
                $region52: #{mha_forward.3} parent=50 // loop_pre_header
                  _
                $region53: #{mha_forward.3} parent=50 // loop_header
                  %s287 = sphi 0, %s291
                  %p288 = scmp.ge.s32.totalorder %s287, 1
                  %s292 = sphi %s259, %s259
                  %s293 = sphi %s256, %s256
                $region54: #{mha_forward.3} parent=50 // loop_header_branch
                  %290 = sbr.rel (%p288) target = $region58
                $region55: #{mha_forward.3} parent=50 // loop_body
                  _
                $region56: #{mha_forward.3} parent=50 // loop_footer
                  %s291 = sadd.s32 1, %s287
                $region57: #{mha_forward.3} parent=50 // loop_footer_branch
                  %286 = sbr.rel target = $region53
                $region58: #{mha_forward.3} parent=50 // loop_exit
                  _
                %s295 = ssub.s32 16, 1
                loop: start=0, step=1, limit=1
                $region59: #{mha_forward.3} parent=50 // loop_pre_header
                  _
                $region60: #{mha_forward.3} parent=50 // loop_header
                  %s297 = sphi 0, %s301
                  %p298 = scmp.ge.s32.totalorder %s297, 1
                  %s302 = sphi %s259, %s259
                  %s303 = sphi %s256, %s256
                $region61: #{mha_forward.3} parent=50 // loop_header_branch
                  %300 = sbr.rel (%p298) target = $region65
                $region62: #{mha_forward.3} parent=50 // loop_body
                  %v304 = vld [vmem:[%s302] sm:%s295]
                  %305 = vst [vmem:[%s303] sm:%s295] %v304
                  %v306 = vld [vmem:[%s302 + $0x8] sm:%s295]
                  %307 = vst [vmem:[%s303 + $0x4] sm:%s295] %v306
                  %v308 = vld [vmem:[%s302 + $0x10] sm:%s295]
                  %309 = vst [vmem:[%s303 + $0x8] sm:%s295] %v308
                  %v310 = vld [vmem:[%s302 + $0x18] sm:%s295]
                  %311 = vst [vmem:[%s303 + $0xc] sm:%s295] %v310
                $region63: #{mha_forward.3} parent=50 // loop_footer
                  %s301 = sadd.s32 1, %s297
                $region64: #{mha_forward.3} parent=50 // loop_footer_branch
                  %296 = sbr.rel target = $region60
                $region65: #{mha_forward.3} parent=50 // loop_exit
                  _
              $region51: #{mha_forward.3} parent=35 // pred_fallthru
                _
            $region36: #{mha_forward.3} parent=31 // pred_fallthru
              _
            // Predicated region
            $region37: #{mha_forward.3} parent=31 // pred_check
              _
            $region38: #{mha_forward.3} parent=31 // pred_check_branch
              %265 = sbr.rel (0) target = $region40
            $region39: #{mha_forward.3} parent=31 // pred_region
              %s267 = ssub.s32 16, 1
              loop: start=0, step=1, limit=1
              $region41: #{mha_forward.3} parent=39 // loop_pre_header
                _
              $region42: #{mha_forward.3} parent=39 // loop_header
                %s269 = sphi 0, %s273
                %p270 = scmp.ge.s32.totalorder %s269, 1
                %s274 = sphi %s259, %s259
                %s275 = sphi %s256, %s256
              $region43: #{mha_forward.3} parent=39 // loop_header_branch
                %272 = sbr.rel (%p270) target = $region47
              $region44: #{mha_forward.3} parent=39 // loop_body
                %v276 = vld [vmem:[%s274] sm:%s267]
                %277 = vst [vmem:[%s275] sm:%s267] %v276
                %v278 = vld [vmem:[%s274 + $0x8] sm:%s267]
                %279 = vst [vmem:[%s275 + $0x4] sm:%s267] %v278
                %v280 = vld [vmem:[%s274 + $0x10] sm:%s267]
                %281 = vst [vmem:[%s275 + $0x8] sm:%s267] %v280
                %v282 = vld [vmem:[%s274 + $0x18] sm:%s267]
                %283 = vst [vmem:[%s275 + $0xc] sm:%s267] %v282
              $region45: #{mha_forward.3} parent=39 // loop_footer
                %s273 = sadd.s32 1, %s269
              $region46: #{mha_forward.3} parent=39 // loop_footer_branch
                %268 = sbr.rel target = $region42
              $region47: #{mha_forward.3} parent=39 // loop_exit
                _
            $region40: #{mha_forward.3} parent=31 // pred_fallthru
              _
          $region32: #{mha_forward.3} parent=27 // pred_fallthru
            _
          %312 = vnop
        $region28: #{mha_forward.3} parent=23 // pred_fallthru
          _
        // Predicated region
        $region66: #{mha_forward.3} parent=23 // pred_check
          %p313 = pneg %p91
        $region67: #{mha_forward.3} parent=23 // pred_check_branch
          %315 = sbr.rel (%p313) target = $region69
        $region68: #{mha_forward.3} parent=23 // pred_region
          %s316 = sand.u32 %s81, 1
          %s317 = sand.u32 %s81, 1
          %s318 = smul.addr %s317, 16
          %s319 = scalar_lea.vmem [#allocation9], %s318
          %s320 = sadd.s32 %s31, %s29
          %s321 = sadd.s32 %s320, 8
          %s322 = smul.addr %s321, 4
          %s323 = scalar_lea.vmem %s2, %s322
          // Predicated region
          $region70: #{mha_forward.3} parent=68 // pred_check
            _
          $region71: #{mha_forward.3} parent=68 // pred_check_branch
            %325 = sbr.rel (0) target = $region73
          $region72: #{mha_forward.3} parent=68 // pred_region
            // Predicated region
            $region74: #{mha_forward.3} parent=72 // pred_check
              _
            $region75: #{mha_forward.3} parent=72 // pred_check_branch
              %327 = sbr.rel target = $region77
            $region76: #{mha_forward.3} parent=72 // pred_region
              // Predicated region
              $region89: #{mha_forward.3} parent=76 // pred_check
                _
              $region90: #{mha_forward.3} parent=76 // pred_check_branch
                %349 = sbr.rel (0) target = $region92
              $region91: #{mha_forward.3} parent=76 // pred_region
                loop: start=0, step=1, limit=1
                $region93: #{mha_forward.3} parent=91 // loop_pre_header
                  _
                $region94: #{mha_forward.3} parent=91 // loop_header
                  %s351 = sphi 0, %s355
                  %p352 = scmp.ge.s32.totalorder %s351, 1
                  %s356 = sphi %s323, %s323
                  %s357 = sphi %s319, %s319
                $region95: #{mha_forward.3} parent=91 // loop_header_branch
                  %354 = sbr.rel (%p352) target = $region99
                $region96: #{mha_forward.3} parent=91 // loop_body
                  _
                $region97: #{mha_forward.3} parent=91 // loop_footer
                  %s355 = sadd.s32 1, %s351
                $region98: #{mha_forward.3} parent=91 // loop_footer_branch
                  %350 = sbr.rel target = $region94
                $region99: #{mha_forward.3} parent=91 // loop_exit
                  _
                %s359 = ssub.s32 16, 1
                loop: start=0, step=1, limit=1
                $region100: #{mha_forward.3} parent=91 // loop_pre_header
                  _
                $region101: #{mha_forward.3} parent=91 // loop_header
                  %s361 = sphi 0, %s365
                  %p362 = scmp.ge.s32.totalorder %s361, 1
                  %s366 = sphi %s323, %s323
                  %s367 = sphi %s319, %s319
                $region102: #{mha_forward.3} parent=91 // loop_header_branch
                  %364 = sbr.rel (%p362) target = $region106
                $region103: #{mha_forward.3} parent=91 // loop_body
                  %v368 = vld [vmem:[%s366] sm:%s359]
                  %369 = vst [vmem:[%s367] sm:%s359] %v368
                  %v370 = vld [vmem:[%s366 + $0x8] sm:%s359]
                  %371 = vst [vmem:[%s367 + $0x4] sm:%s359] %v370
                  %v372 = vld [vmem:[%s366 + $0x10] sm:%s359]
                  %373 = vst [vmem:[%s367 + $0x8] sm:%s359] %v372
                  %v374 = vld [vmem:[%s366 + $0x18] sm:%s359]
                  %375 = vst [vmem:[%s367 + $0xc] sm:%s359] %v374
                $region104: #{mha_forward.3} parent=91 // loop_footer
                  %s365 = sadd.s32 1, %s361
                $region105: #{mha_forward.3} parent=91 // loop_footer_branch
                  %360 = sbr.rel target = $region101
                $region106: #{mha_forward.3} parent=91 // loop_exit
                  _
              $region92: #{mha_forward.3} parent=76 // pred_fallthru
                _
            $region77: #{mha_forward.3} parent=72 // pred_fallthru
              _
            // Predicated region
            $region78: #{mha_forward.3} parent=72 // pred_check
              _
            $region79: #{mha_forward.3} parent=72 // pred_check_branch
              %329 = sbr.rel (0) target = $region81
            $region80: #{mha_forward.3} parent=72 // pred_region
              %s331 = ssub.s32 16, 1
              loop: start=0, step=1, limit=1
              $region82: #{mha_forward.3} parent=80 // loop_pre_header
                _
              $region83: #{mha_forward.3} parent=80 // loop_header
                %s333 = sphi 0, %s337
                %p334 = scmp.ge.s32.totalorder %s333, 1
                %s338 = sphi %s323, %s323
                %s339 = sphi %s319, %s319
              $region84: #{mha_forward.3} parent=80 // loop_header_branch
                %336 = sbr.rel (%p334) target = $region88
              $region85: #{mha_forward.3} parent=80 // loop_body
                %v340 = vld [vmem:[%s338] sm:%s331]
                %341 = vst [vmem:[%s339] sm:%s331] %v340
                %v342 = vld [vmem:[%s338 + $0x8] sm:%s331]
                %343 = vst [vmem:[%s339 + $0x4] sm:%s331] %v342
                %v344 = vld [vmem:[%s338 + $0x10] sm:%s331]
                %345 = vst [vmem:[%s339 + $0x8] sm:%s331] %v344
                %v346 = vld [vmem:[%s338 + $0x18] sm:%s331]
                %347 = vst [vmem:[%s339 + $0xc] sm:%s331] %v346
              $region86: #{mha_forward.3} parent=80 // loop_footer
                %s337 = sadd.s32 1, %s333
              $region87: #{mha_forward.3} parent=80 // loop_footer_branch
                %332 = sbr.rel target = $region83
              $region88: #{mha_forward.3} parent=80 // loop_exit
                _
            $region81: #{mha_forward.3} parent=72 // pred_fallthru
              _
          $region73: #{mha_forward.3} parent=68 // pred_fallthru
            _
          %376 = vnop
        $region69: #{mha_forward.3} parent=23 // pred_fallthru
          _
        // Predicated region
        $region107: #{mha_forward.3} parent=23 // pred_check
          %p377 = pneg %p119
        $region108: #{mha_forward.3} parent=23 // pred_check_branch
          %379 = sbr.rel (%p377) target = $region110
        $region109: #{mha_forward.3} parent=23 // pred_region
          %s380 = sand.u32 %s109, 1
          %s381 = sand.u32 %s109, 1
          %s382 = smul.addr %s381, 16
          %s383 = scalar_lea.vmem [#allocation10], %s382
          %s384 = sadd.s32 %s31, %s29
          %s385 = sadd.s32 %s384, 16
          %s386 = smul.addr %s385, 4
          %s387 = scalar_lea.vmem %s3, %s386
          // Predicated region
          $region111: #{mha_forward.3} parent=109 // pred_check
            _
          $region112: #{mha_forward.3} parent=109 // pred_check_branch
            %389 = sbr.rel (0) target = $region114
          $region113: #{mha_forward.3} parent=109 // pred_region
            // Predicated region
            $region115: #{mha_forward.3} parent=113 // pred_check
              _
            $region116: #{mha_forward.3} parent=113 // pred_check_branch
              %391 = sbr.rel target = $region118
            $region117: #{mha_forward.3} parent=113 // pred_region
              // Predicated region
              $region130: #{mha_forward.3} parent=117 // pred_check
                _
              $region131: #{mha_forward.3} parent=117 // pred_check_branch
                %413 = sbr.rel (0) target = $region133
              $region132: #{mha_forward.3} parent=117 // pred_region
                loop: start=0, step=1, limit=1
                $region134: #{mha_forward.3} parent=132 // loop_pre_header
                  _
                $region135: #{mha_forward.3} parent=132 // loop_header
                  %s415 = sphi 0, %s419
                  %p416 = scmp.ge.s32.totalorder %s415, 1
                  %s420 = sphi %s387, %s387
                  %s421 = sphi %s383, %s383
                $region136: #{mha_forward.3} parent=132 // loop_header_branch
                  %418 = sbr.rel (%p416) target = $region140
                $region137: #{mha_forward.3} parent=132 // loop_body
                  _
                $region138: #{mha_forward.3} parent=132 // loop_footer
                  %s419 = sadd.s32 1, %s415
                $region139: #{mha_forward.3} parent=132 // loop_footer_branch
                  %414 = sbr.rel target = $region135
                $region140: #{mha_forward.3} parent=132 // loop_exit
                  _
                %s423 = ssub.s32 16, 1
                loop: start=0, step=1, limit=1
                $region141: #{mha_forward.3} parent=132 // loop_pre_header
                  _
                $region142: #{mha_forward.3} parent=132 // loop_header
                  %s425 = sphi 0, %s429
                  %p426 = scmp.ge.s32.totalorder %s425, 1
                  %s430 = sphi %s387, %s387
                  %s431 = sphi %s383, %s383
                $region143: #{mha_forward.3} parent=132 // loop_header_branch
                  %428 = sbr.rel (%p426) target = $region147
                $region144: #{mha_forward.3} parent=132 // loop_body
                  %v432 = vld [vmem:[%s430] sm:%s423]
                  %433 = vst [vmem:[%s431] sm:%s423] %v432
                  %v434 = vld [vmem:[%s430 + $0x8] sm:%s423]
                  %435 = vst [vmem:[%s431 + $0x4] sm:%s423] %v434
                  %v436 = vld [vmem:[%s430 + $0x10] sm:%s423]
                  %437 = vst [vmem:[%s431 + $0x8] sm:%s423] %v436
                  %v438 = vld [vmem:[%s430 + $0x18] sm:%s423]
                  %439 = vst [vmem:[%s431 + $0xc] sm:%s423] %v438
                $region145: #{mha_forward.3} parent=132 // loop_footer
                  %s429 = sadd.s32 1, %s425
                $region146: #{mha_forward.3} parent=132 // loop_footer_branch
                  %424 = sbr.rel target = $region142
                $region147: #{mha_forward.3} parent=132 // loop_exit
                  _
              $region133: #{mha_forward.3} parent=117 // pred_fallthru
                _
            $region118: #{mha_forward.3} parent=113 // pred_fallthru
              _
            // Predicated region
            $region119: #{mha_forward.3} parent=113 // pred_check
              _
            $region120: #{mha_forward.3} parent=113 // pred_check_branch
              %393 = sbr.rel (0) target = $region122
            $region121: #{mha_forward.3} parent=113 // pred_region
              %s395 = ssub.s32 16, 1
              loop: start=0, step=1, limit=1
              $region123: #{mha_forward.3} parent=121 // loop_pre_header
                _
              $region124: #{mha_forward.3} parent=121 // loop_header
                %s397 = sphi 0, %s401
                %p398 = scmp.ge.s32.totalorder %s397, 1
                %s402 = sphi %s387, %s387
                %s403 = sphi %s383, %s383
              $region125: #{mha_forward.3} parent=121 // loop_header_branch
                %400 = sbr.rel (%p398) target = $region129
              $region126: #{mha_forward.3} parent=121 // loop_body
                %v404 = vld [vmem:[%s402] sm:%s395]
                %405 = vst [vmem:[%s403] sm:%s395] %v404
                %v406 = vld [vmem:[%s402 + $0x8] sm:%s395]
                %407 = vst [vmem:[%s403 + $0x4] sm:%s395] %v406
                %v408 = vld [vmem:[%s402 + $0x10] sm:%s395]
                %409 = vst [vmem:[%s403 + $0x8] sm:%s395] %v408
                %v410 = vld [vmem:[%s402 + $0x18] sm:%s395]
                %411 = vst [vmem:[%s403 + $0xc] sm:%s395] %v410
              $region127: #{mha_forward.3} parent=121 // loop_footer
                %s401 = sadd.s32 1, %s397
              $region128: #{mha_forward.3} parent=121 // loop_footer_branch
                %396 = sbr.rel target = $region124
              $region129: #{mha_forward.3} parent=121 // loop_exit
                _
            $region122: #{mha_forward.3} parent=113 // pred_fallthru
              _
          $region114: #{mha_forward.3} parent=109 // pred_fallthru
            _
          %440 = vnop
        $region110: #{mha_forward.3} parent=23 // pred_fallthru
          _
        // Predicated region
        $region148: #{mha_forward.3} parent=23 // pred_check
          %p441 = pneg %p149
        $region149: #{mha_forward.3} parent=23 // pred_check_branch
          %443 = sbr.rel (%p441) target = $region151
        $region150: #{mha_forward.3} parent=23 // pred_region
          %p444 = scmp.lt.s32.totalorder %s29, 1
          %s445 = scalar_select %p444, %s29, 1
          %p446 = scmp.lt.s32.totalorder %s30, 0
          %s447 = scalar_select %p446, %s30, 0
          %p448 = scmp.lt.s32.totalorder %s31, 0
          %s449 = scalar_select %p448, %s31, 0
          %s450 = sadd.s32 %s449, %s447
          %s451 = sadd.s32 %s450, %s445
          %s452 = smul.addr %s451, 4
          %s453 = scalar_lea.vmem %s4, %s452
        $region151: #{mha_forward.3} parent=23 // pred_fallthru
          _
      $region24: #{mha_forward.3} parent=5 // pred_fallthru
        _
      %p454 = scmp.le.s32.totalorder 1, %s22
      %p455 = scmp.lt.s32.totalorder %s22, 3
      %p456 = pnand %p454, %p455
      %p457 = pneg %p456
      // Predicated region
      $region152: #{mha_forward.3} parent=5 // pred_check
        _
      $region153: #{mha_forward.3} parent=5 // pred_check_branch
        %459 = sbr.rel (%p456) target = $region155
      $region154: #{mha_forward.3} parent=5 // pred_region
        %s460 = ssub.s32 %s22, 1
        %s461 = sand.u32 %s56, 1
        %s462 = sand.u32 %s56, 1
        %s463 = smul.addr %s462, 16
        %s464 = scalar_lea.vmem [#allocation8], %s463
        // Predicated region
        $region156: #{mha_forward.3} parent=154 // pred_check
          %p465 = pneg %p69
        $region157: #{mha_forward.3} parent=154 // pred_check_branch
          %467 = sbr.rel (%p465) target = $region159
        $region158: #{mha_forward.3} parent=154 // pred_region
          _
        $region159: #{mha_forward.3} parent=154 // pred_fallthru
          _
        %s468 = sand.u32 %s84, 1
        %s469 = sand.u32 %s84, 1
        %s470 = smul.addr %s469, 16
        %s471 = scalar_lea.vmem [#allocation9], %s470
        // Predicated region
        $region160: #{mha_forward.3} parent=154 // pred_check
          %p472 = pneg %p97
        $region161: #{mha_forward.3} parent=154 // pred_check_branch
          %474 = sbr.rel (%p472) target = $region163
        $region162: #{mha_forward.3} parent=154 // pred_region
          _
        $region163: #{mha_forward.3} parent=154 // pred_fallthru
          _
        %s475 = sand.u32 %s112, 1
        %s476 = sand.u32 %s112, 1
        %s477 = smul.addr %s476, 16
        %s478 = scalar_lea.vmem [#allocation10], %s477
        // Predicated region
        $region164: #{mha_forward.3} parent=154 // pred_check
          %p479 = pneg %p125
        $region165: #{mha_forward.3} parent=154 // pred_check_branch
          %481 = sbr.rel (%p479) target = $region167
        $region166: #{mha_forward.3} parent=154 // pred_region
          _
        $region167: #{mha_forward.3} parent=154 // pred_fallthru
          _
        %s482 = sand.u32 %s56, 1
        %s483 = sand.u32 %s56, 1
        %s484 = smul.addr %s483, 16
        %s485 = scalar_lea.vmem [#allocation8], %s484
        %p486 = pneg %p69
        %p487 = pneg %p66
        %s488 = sand.u32 %s84, 1
        %s489 = sand.u32 %s84, 1
        %s490 = smul.addr %s489, 16
        %s491 = scalar_lea.vmem [#allocation9], %s490
        %p492 = pneg %p97
        %p493 = pneg %p94
        %s494 = sand.u32 %s112, 1
        %s495 = sand.u32 %s112, 1
        %s496 = smul.addr %s495, 16
        %s497 = scalar_lea.vmem [#allocation10], %s496
        %p498 = pneg %p125
        %p499 = pneg %p122
        %p500 = scmp.lt.s32.totalorder %s32, 1
        %s501 = scalar_select %p500, %s32, 1
        %p502 = scmp.lt.s32.totalorder %s33, 0
        %s503 = scalar_select %p502, %s33, 0
        %p504 = scmp.lt.s32.totalorder %s34, 0
        %s505 = scalar_select %p504, %s34, 0
        %s506 = sadd.s32 %s505, %s503
        %s507 = sadd.s32 %s506, %s501
        %s508 = smul.addr %s507, 4
        %s509 = scalar_lea.vmem %s4, %s508
        %p510 = pneg %p155
        %p511 = pneg %p152
        %p512 = pneg %p176
        %p513 = pneg %p173
        %p514 = pneg %p197
        %p515 = pneg %p194
        %p516 = pneg %p225
        %p517 = pneg %p222
        %s518 = sand.u32 %s212, 1
        %s519 = scalar_lea.sflag [#allocation12], %s518
        %s520 = sand.u32 %s212, 1
        %s521 = smul.addr %s520, 8
        %s522 = scalar_lea.vmem [#allocation11], %s521
        %p523 = scmp.lt.s32.totalorder %s32, 1
        %s524 = scalar_select %p523, %s32, 1
        %p525 = scmp.lt.s32.totalorder %s33, 0
        %s526 = scalar_select %p525, %s33, 0
        %p527 = scmp.lt.s32.totalorder %s34, 0
        %s528 = scalar_select %p527, %s34, 0
        %s529 = sadd.s32 %s528, %s526
        %s530 = sadd.s32 %s529, %s524
        %s531 = smul.addr %s530, 4
        %s532 = scalar_lea.vmem %s4, %s531
        %p534 = scmp.eq.s32.totalorder %s34, 0
        // Predicated region
        $region168: #{mha_forward.3} parent=154 // pred_check
          %p535 = pneg %p534
        $region169: #{mha_forward.3} parent=154 // pred_check_branch
          %537 = sbr.rel (%p535) target = $region171
        $region170: #{mha_forward.3} parent=154 // pred_region
          %vm538 = vcmask 7168
          %539 = vst.msk [vmem:[#allocation2] sm:$0xff] %vm538, -inf
          %540 = vst.msk [vmem:[#allocation2 + $0x8] sm:$0xff] %vm538, -inf
          %541 = vst.msk [vmem:[#allocation2 + $0x10] sm:$0xff] %vm538, -inf
          %542 = vst.msk [vmem:[#allocation2 + $0x18] sm:$0xff] %vm538, -inf
          %543 = vst.msk [vmem:[#allocation3] sm:$0xff] %vm538, 0.0
          %544 = vst.msk [vmem:[#allocation3 + $0x8] sm:$0xff] %vm538, 0.0
          %545 = vst.msk [vmem:[#allocation3 + $0x10] sm:$0xff] %vm538, 0.0
          %546 = vst.msk [vmem:[#allocation3 + $0x18] sm:$0xff] %vm538, 0.0
          %vm547 = vcmask 64512
          %548 = vst.msk [vmem:[#allocation4] sm:$0xff] %vm547, 0.0
          %549 = vst.msk [vmem:[#allocation4 + $0x8] sm:$0xff] %vm547, 0.0
          %550 = vst.msk [vmem:[#allocation4 + $0x10] sm:$0xff] %vm547, 0.0
          %551 = vst.msk [vmem:[#allocation4 + $0x18] sm:$0xff] %vm547, 0.0
        $region171: #{mha_forward.3} parent=154 // pred_fallthru
          _
        %s552 = sadd.s32 %s32, %s33
        %s553 = sshra.s32 %s34, 7
        %s554 = sand.u32 %s34, 127
        %s555 = sadd.s32 %s553, %s552
        %s556 = smul.u32 %s555, 128
        %s557 = sshra.s32 %s34, 7
        %s558 = sand.u32 %s34, 127
        %s559 = sadd.s32 %s556, %s558
        %s560 = sld [smem:[#allocation7 + %s559]]
        %p561 = scmp.gt.s32.totalorder %s560, 0
        // Predicated region
        $region172: #{mha_forward.3} parent=154 // pred_check
          %p562 = pneg %p561
        $region173: #{mha_forward.3} parent=154 // pred_check_branch
          %564 = sbr.rel (%p562) target = $region175
        $region174: #{mha_forward.3} parent=154 // pred_region
          %v565 = vld [vmem:[%s464] sm:$0xf]
          %v566 = vld [vmem:[%s464 + $0x4] sm:$0xf]
          %v567 = vld [vmem:[%s464 + $0x8] sm:$0xf]
          %v568 = vld [vmem:[%s464 + $0xc] sm:$0xf]
          %v569 = vld [vmem:[%s471] sm:$0xf]
          %v570 = vld [vmem:[%s471 + $0x4] sm:$0xf]
          %v571 = vld [vmem:[%s471 + $0x8] sm:$0xf]
          %v572 = vld [vmem:[%s471 + $0xc] sm:$0xf]
          %v573 = vld [vmem:[%s478] sm:$0xf]
          %v574 = vld [vmem:[%s478 + $0x4] sm:$0xf]
          %v575 = vld [vmem:[%s478 + $0x8] sm:$0xf]
          %v576 = vld [vmem:[%s478 + $0xc] sm:$0xf]
          %v577 = vld [vmem:[%s532] sm:$0xf]
          %v578 = vunpack.c.l.bf16 %v577
          %vm579 = vcmask 64512
          %v581 = vsel %vm579, %v565, 0
          %v584 = vsel %vm579, %v569, 0
          %586 = vmatprep.subr.bf16.mxu0 0
          %587 = vmatpush1.bf16.xpose.msra.mxu0 0
          %588 = vmatprep.subr.bf16.mxu0 0
          %589 = vmatpush1.bf16.xpose.msra.mxu0 0
          %590 = vmatprep.subr.bf16.mxu0 0
          %591 = vmatpush1.bf16.xpose.msra.mxu0 0
          %592 = vmatprep.subr.bf16.mxu0 0
          %593 = vmatpush1.bf16.xpose.msra.mxu0 0
          %594 = vmatprep.subr.bf16.mxu0 0
          %595 = vmatpush1.bf16.xpose.msra.mxu0 0
          %596 = vmatprep.subr.bf16.mxu0 0
          %597 = vmatpush1.bf16.xpose.msra.mxu0 0
          %598 = vmatprep.subr.bf16.mxu0 0
          %599 = vmatpush1.bf16.xpose.msra.mxu0 0
          %600 = vmatprep.subr.bf16.mxu0 0
          %601 = vmatpush1.bf16.xpose.msra.mxu0 %v584
          %602 = vmatprep.subr.bf16.mxu0 0
          %603 = vmatpush2.bf16.xpose.msra.mxu0 0
          %604 = vmatprep.subr.bf16.mxu0 0
          %605 = vmatpush2.bf16.xpose.msra.mxu0 0
          %606 = vmatprep.subr.bf16.mxu0 0
          %607 = vmatpush2.bf16.xpose.msra.mxu0 0
          %608 = vmatprep.subr.bf16.mxu0 0
          %609 = vmatpush2.bf16.xpose.msra.mxu0 0
          %610 = vmatprep.subr.bf16.mxu0 0
          %611 = vmatpush2.bf16.xpose.msra.mxu0 0
          %612 = vmatprep.subr.bf16.mxu0 0
          %613 = vmatpush2.bf16.xpose.msra.mxu0 0
          %614 = vmatprep.subr.bf16.mxu0 0
          %615 = vmatpush2.bf16.xpose.msra.mxu0 0
          %616 = vmatprep.subr.bf16.mxu0 0
          %617 = vmatpush2.bf16.xpose.msra.mxu0 0
          %618 = vmatprep.mubr.bf16.mxu0 0
          %619 = vmatmul.mubr.bf16.gmra.mxu0 %v581
          %v620 = vpop.f32.mrf.mxu0
          %v621 = vadd.f32 %v578, %v620
          %v622 = vpop.f32.mrf.mxu0
          %v623 = vpop.f32.mrf.mxu0
          %v624 = vpop.f32.mrf.mxu0
          %625 = vdwg.mxu0
          %v627 = vsel %vm579, %v566, 0
          %v630 = vsel %vm579, %v570, 0
          %632 = vmatprep.subr.bf16.mxu0 0
          %633 = vmatpush1.bf16.xpose.msra.mxu0 0
          %634 = vmatprep.subr.bf16.mxu0 0
          %635 = vmatpush1.bf16.xpose.msra.mxu0 0
          %636 = vmatprep.subr.bf16.mxu0 0
          %637 = vmatpush1.bf16.xpose.msra.mxu0 0
          %638 = vmatprep.subr.bf16.mxu0 0
          %639 = vmatpush1.bf16.xpose.msra.mxu0 0
          %640 = vmatprep.subr.bf16.mxu0 0
          %641 = vmatpush1.bf16.xpose.msra.mxu0 0
          %642 = vmatprep.subr.bf16.mxu0 0
          %643 = vmatpush1.bf16.xpose.msra.mxu0 0
          %644 = vmatprep.subr.bf16.mxu0 0
          %645 = vmatpush1.bf16.xpose.msra.mxu0 0
          %646 = vmatprep.subr.bf16.mxu0 0
          %647 = vmatpush1.bf16.xpose.msra.mxu0 %v630
          %648 = vmatprep.subr.bf16.mxu0 0
          %649 = vmatpush2.bf16.xpose.msra.mxu0 0
          %650 = vmatprep.subr.bf16.mxu0 0
          %651 = vmatpush2.bf16.xpose.msra.mxu0 0
          %652 = vmatprep.subr.bf16.mxu0 0
          %653 = vmatpush2.bf16.xpose.msra.mxu0 0
          %654 = vmatprep.subr.bf16.mxu0 0
          %655 = vmatpush2.bf16.xpose.msra.mxu0 0
          %656 = vmatprep.subr.bf16.mxu0 0
          %657 = vmatpush2.bf16.xpose.msra.mxu0 0
          %658 = vmatprep.subr.bf16.mxu0 0
          %659 = vmatpush2.bf16.xpose.msra.mxu0 0
          %660 = vmatprep.subr.bf16.mxu0 0
          %661 = vmatpush2.bf16.xpose.msra.mxu0 0
          %662 = vmatprep.subr.bf16.mxu0 0
          %663 = vmatpush2.bf16.xpose.msra.mxu0 0
          %664 = vmatprep.mubr.bf16.mxu0 0
          %665 = vmatmul.mubr.bf16.gmra.mxu0 %v627
          %v666 = vpop.f32.mrf.mxu0
          %v667 = vadd.f32 %v578, %v666
          %v668 = vpop.f32.mrf.mxu0
          %v669 = vpop.f32.mrf.mxu0
          %v670 = vpop.f32.mrf.mxu0
          %671 = vdwg.mxu0
          %v673 = vsel %vm579, %v567, 0
          %v676 = vsel %vm579, %v571, 0
          %678 = vmatprep.subr.bf16.mxu0 0
          %679 = vmatpush1.bf16.xpose.msra.mxu0 0
          %680 = vmatprep.subr.bf16.mxu0 0
          %681 = vmatpush1.bf16.xpose.msra.mxu0 0
          %682 = vmatprep.subr.bf16.mxu0 0
          %683 = vmatpush1.bf16.xpose.msra.mxu0 0
          %684 = vmatprep.subr.bf16.mxu0 0
          %685 = vmatpush1.bf16.xpose.msra.mxu0 0
          %686 = vmatprep.subr.bf16.mxu0 0
          %687 = vmatpush1.bf16.xpose.msra.mxu0 0
          %688 = vmatprep.subr.bf16.mxu0 0
          %689 = vmatpush1.bf16.xpose.msra.mxu0 0
          %690 = vmatprep.subr.bf16.mxu0 0
          %691 = vmatpush1.bf16.xpose.msra.mxu0 0
          %692 = vmatprep.subr.bf16.mxu0 0
          %693 = vmatpush1.bf16.xpose.msra.mxu0 %v676
          %694 = vmatprep.subr.bf16.mxu0 0
          %695 = vmatpush2.bf16.xpose.msra.mxu0 0
          %696 = vmatprep.subr.bf16.mxu0 0
          %697 = vmatpush2.bf16.xpose.msra.mxu0 0
          %698 = vmatprep.subr.bf16.mxu0 0
          %699 = vmatpush2.bf16.xpose.msra.mxu0 0
          %700 = vmatprep.subr.bf16.mxu0 0
          %701 = vmatpush2.bf16.xpose.msra.mxu0 0
          %702 = vmatprep.subr.bf16.mxu0 0
          %703 = vmatpush2.bf16.xpose.msra.mxu0 0
          %704 = vmatprep.subr.bf16.mxu0 0
          %705 = vmatpush2.bf16.xpose.msra.mxu0 0
          %706 = vmatprep.subr.bf16.mxu0 0
          %707 = vmatpush2.bf16.xpose.msra.mxu0 0
          %708 = vmatprep.subr.bf16.mxu0 0
          %709 = vmatpush2.bf16.xpose.msra.mxu0 0
          %710 = vmatprep.mubr.bf16.mxu0 0
          %711 = vmatmul.mubr.bf16.gmra.mxu0 %v673
          %v712 = vpop.f32.mrf.mxu0
          %v713 = vadd.f32 %v578, %v712
          %v714 = vpop.f32.mrf.mxu0
          %v715 = vpop.f32.mrf.mxu0
          %v716 = vpop.f32.mrf.mxu0
          %717 = vdwg.mxu0
          %v719 = vsel %vm579, %v568, 0
          %v722 = vsel %vm579, %v572, 0
          %724 = vmatprep.subr.bf16.mxu0 0
          %725 = vmatpush1.bf16.xpose.msra.mxu0 0
          %726 = vmatprep.subr.bf16.mxu0 0
          %727 = vmatpush1.bf16.xpose.msra.mxu0 0
          %728 = vmatprep.subr.bf16.mxu0 0
          %729 = vmatpush1.bf16.xpose.msra.mxu0 0
          %730 = vmatprep.subr.bf16.mxu0 0
          %731 = vmatpush1.bf16.xpose.msra.mxu0 0
          %732 = vmatprep.subr.bf16.mxu0 0
          %733 = vmatpush1.bf16.xpose.msra.mxu0 0
          %734 = vmatprep.subr.bf16.mxu0 0
          %735 = vmatpush1.bf16.xpose.msra.mxu0 0
          %736 = vmatprep.subr.bf16.mxu0 0
          %737 = vmatpush1.bf16.xpose.msra.mxu0 0
          %738 = vmatprep.subr.bf16.mxu0 0
          %739 = vmatpush1.bf16.xpose.msra.mxu0 %v722
          %740 = vmatprep.subr.bf16.mxu0 0
          %741 = vmatpush2.bf16.xpose.msra.mxu0 0
          %742 = vmatprep.subr.bf16.mxu0 0
          %743 = vmatpush2.bf16.xpose.msra.mxu0 0
          %744 = vmatprep.subr.bf16.mxu0 0
          %745 = vmatpush2.bf16.xpose.msra.mxu0 0
          %746 = vmatprep.subr.bf16.mxu0 0
          %747 = vmatpush2.bf16.xpose.msra.mxu0 0
          %748 = vmatprep.subr.bf16.mxu0 0
          %749 = vmatpush2.bf16.xpose.msra.mxu0 0
          %750 = vmatprep.subr.bf16.mxu0 0
          %751 = vmatpush2.bf16.xpose.msra.mxu0 0
          %752 = vmatprep.subr.bf16.mxu0 0
          %753 = vmatpush2.bf16.xpose.msra.mxu0 0
          %754 = vmatprep.subr.bf16.mxu0 0
          %755 = vmatpush2.bf16.xpose.msra.mxu0 0
          %756 = vmatprep.mubr.bf16.mxu0 0
          %757 = vmatmul.mubr.bf16.gmra.mxu0 %v719
          %v758 = vpop.f32.mrf.mxu0
          %v759 = vadd.f32 %v578, %v758
          %v760 = vpop.f32.mrf.mxu0
          %v761 = vpop.f32.mrf.mxu0
          %v762 = vpop.f32.mrf.mxu0
          %763 = vdwg.mxu0
          %v764 = vld [vmem:[#allocation2] sm:$0xff]
          %v765 = vld [vmem:[#allocation2 + $0x8] sm:$0xff]
          %v766 = vld [vmem:[#allocation2 + $0x10] sm:$0xff]
          %v767 = vld [vmem:[#allocation2 + $0x18] sm:$0xff]
          %v768 = vsel %vm579, %v621, -inf
          %769 = vmax.xlane.f32.xlu0 %v768
          %v770 = vpop.xlane.xlu0 %769
          %v771 = vsel %vm579, %v667, -inf
          %772 = vmax.xlane.f32.xlu0 %v771
          %v773 = vpop.xlane.xlu0 %772
          %v774 = vsel %vm579, %v713, -inf
          %775 = vmax.xlane.f32.xlu0 %v774
          %v776 = vpop.xlane.xlu0 %775
          %v777 = vsel %vm579, %v759, -inf
          %778 = vmax.xlane.f32.xlu0 %v777
          %v779 = vpop.xlane.xlu0 %778
          %v780 = vmax.f32 %v764, %v770
          %v781 = vmax.f32 %v765, %v773
          %v782 = vmax.f32 %v766, %v776
          %v783 = vmax.f32 %v767, %v779
          %v784 = vsub.f32 %v764, %v780
          %v785 = vsub.f32 %v765, %v781
          %v786 = vsub.f32 %v766, %v782
          %v787 = vsub.f32 %v767, %v783
          %v788 = vmul.f32 %v784, 1.442695
          %v789 = vpow.pop %v788
          %v790 = vmul.f32 %v785, 1.442695
          %v791 = vpow.pop %v790
          %v792 = vmul.f32 %v786, 1.442695
          %v793 = vpow.pop %v792
          %v794 = vmul.f32 %v787, 1.442695
          %v795 = vpow.pop %v794
          %797 = vset.pattern.permute.xlu0 0
          %798 = vperm.xlu0 %797, %v780
          %v799 = vpop.permute.xlu0 %798
          %802 = vset.pattern.permute.xlu0 0
          %803 = vperm.xlu0 %802, %v781
          %v804 = vpop.permute.xlu0 %803
          %807 = vset.pattern.permute.xlu0 0
          %808 = vperm.xlu0 %807, %v782
          %v809 = vpop.permute.xlu0 %808
          %812 = vset.pattern.permute.xlu0 0
          %813 = vperm.xlu0 %812, %v783
          %v814 = vpop.permute.xlu0 %813
          %v816 = vsub.f32 %v621, %v799
          %v817 = vsub.f32 %v667, %v804
          %v818 = vsub.f32 %v713, %v809
          %v819 = vsub.f32 %v759, %v814
          %v820 = vmul.f32 %v816, 1.442695
          %v821 = vpow.pop %v820
          %v822 = vmul.f32 %v817, 1.442695
          %v823 = vpow.pop %v822
          %v824 = vmul.f32 %v818, 1.442695
          %v825 = vpow.pop %v824
          %v826 = vmul.f32 %v819, 1.442695
          %v827 = vpow.pop %v826
          %v828 = vld [vmem:[#allocation3] sm:$0xff]
          %v829 = vld [vmem:[#allocation3 + $0x8] sm:$0xff]
          %v830 = vld [vmem:[#allocation3 + $0x10] sm:$0xff]
          %v831 = vld [vmem:[#allocation3 + $0x18] sm:$0xff]
          %v832 = vmul.f32 %v789, %v828
          %v833 = vmul.f32 %v791, %v829
          %v834 = vmul.f32 %v793, %v830
          %v835 = vmul.f32 %v795, %v831
          %v836 = vsel %vm579, %v821, 0.0
          %837 = vadd.xlane.f32.xlu0 %v836
          %v838 = vpop.xlane.xlu0 %837
          %v839 = vsel %vm579, %v823, 0.0
          %840 = vadd.xlane.f32.xlu0 %v839
          %v841 = vpop.xlane.xlu0 %840
          %v842 = vsel %vm579, %v825, 0.0
          %843 = vadd.xlane.f32.xlu0 %v842
          %v844 = vpop.xlane.xlu0 %843
          %v845 = vsel %vm579, %v827, 0.0
          %846 = vadd.xlane.f32.xlu0 %v845
          %v847 = vpop.xlane.xlu0 %846
          %v848 = vadd.f32 %v832, %v838
          %v849 = vadd.f32 %v833, %v841
          %v850 = vadd.f32 %v834, %v844
          %v851 = vadd.f32 %v835, %v847
          %vm852 = vcmask 7168
          %853 = vst.msk [vmem:[#allocation3] sm:$0xff] %vm852, %v848
          %854 = vst.msk [vmem:[#allocation3 + $0x8] sm:$0xff] %vm852, %v849
          %855 = vst.msk [vmem:[#allocation3 + $0x10] sm:$0xff] %vm852, %v850
          %856 = vst.msk [vmem:[#allocation3 + $0x18] sm:$0xff] %vm852, %v851
          %v857 = vld [vmem:[#allocation4] sm:$0xff]
          %v858 = vld [vmem:[#allocation4 + $0x8] sm:$0xff]
          %v859 = vld [vmem:[#allocation4 + $0x10] sm:$0xff]
          %v860 = vld [vmem:[#allocation4 + $0x18] sm:$0xff]
          %862 = vset.pattern.permute.xlu0 0
          %863 = vperm.xlu0 %862, %v789
          %v864 = vpop.permute.xlu0 %863
          %867 = vset.pattern.permute.xlu0 0
          %868 = vperm.xlu0 %867, %v791
          %v869 = vpop.permute.xlu0 %868
          %872 = vset.pattern.permute.xlu0 0
          %873 = vperm.xlu0 %872, %v793
          %v874 = vpop.permute.xlu0 %873
          %877 = vset.pattern.permute.xlu0 0
          %878 = vperm.xlu0 %877, %v795
          %v879 = vpop.permute.xlu0 %878
          %v881 = vmul.f32 %v864, %v857
          %v882 = vmul.f32 %v869, %v858
          %v883 = vmul.f32 %v874, %v859
          %v884 = vmul.f32 %v879, %v860
          %v885 = vpack.c.bf16 %v821, %v821
          %v886 = vpack.c.bf16 %v823, %v823
          %v887 = vpack.c.bf16 %v825, %v825
          %v888 = vpack.c.bf16 %v827, %v827
          %v890 = vsel %vm579, %v885, 0
          %vm892 = vcmask 1043456
          %v894 = vsel %vm892, %v573, 0
          %896 = vmatprep.subr.bf16.mxu0 0
          %897 = vmatpush1.bf16.msra.mxu0 0
          %898 = vmatprep.subr.bf16.mxu0 0
          %899 = vmatpush1.bf16.msra.mxu0 0
          %900 = vmatprep.subr.bf16.mxu0 0
          %901 = vmatpush1.bf16.msra.mxu0 0
          %902 = vmatprep.subr.bf16.mxu0 0
          %903 = vmatpush1.bf16.msra.mxu0 0
          %904 = vmatprep.subr.bf16.mxu0 0
          %905 = vmatpush1.bf16.msra.mxu0 0
          %906 = vmatprep.subr.bf16.mxu0 0
          %907 = vmatpush1.bf16.msra.mxu0 0
          %908 = vmatprep.subr.bf16.mxu0 0
          %909 = vmatpush1.bf16.msra.mxu0 0
          %910 = vmatprep.subr.bf16.mxu0 0
          %911 = vmatpush1.bf16.msra.mxu0 %v894
          %912 = vmatprep.subr.bf16.mxu0 0
          %913 = vmatpush2.bf16.msra.mxu0 0
          %914 = vmatprep.subr.bf16.mxu0 0
          %915 = vmatpush2.bf16.msra.mxu0 0
          %916 = vmatprep.subr.bf16.mxu0 0
          %917 = vmatpush2.bf16.msra.mxu0 0
          %918 = vmatprep.subr.bf16.mxu0 0
          %919 = vmatpush2.bf16.msra.mxu0 0
          %920 = vmatprep.subr.bf16.mxu0 0
          %921 = vmatpush2.bf16.msra.mxu0 0
          %922 = vmatprep.subr.bf16.mxu0 0
          %923 = vmatpush2.bf16.msra.mxu0 0
          %924 = vmatprep.subr.bf16.mxu0 0
          %925 = vmatpush2.bf16.msra.mxu0 0
          %926 = vmatprep.subr.bf16.mxu0 0
          %927 = vmatpush2.bf16.msra.mxu0 0
          %928 = vmatprep.mubr.bf16.mxu0 0
          %929 = vmatmul.mubr.bf16.gmra.mxu0 %v890
          %v930 = vpop.f32.mrf.mxu0
          %v931 = vadd.f32 0.0, %v930
          %v932 = vpop.f32.mrf.mxu0
          %v933 = vpop.f32.mrf.mxu0
          %v934 = vpop.f32.mrf.mxu0
          %935 = vdwg.mxu0
          %v937 = vsel %vm579, %v886, 0
          %v940 = vsel %vm892, %v574, 0
          %942 = vmatprep.subr.bf16.mxu0 0
          %943 = vmatpush1.bf16.msra.mxu0 0
          %944 = vmatprep.subr.bf16.mxu0 0
          %945 = vmatpush1.bf16.msra.mxu0 0
          %946 = vmatprep.subr.bf16.mxu0 0
          %947 = vmatpush1.bf16.msra.mxu0 0
          %948 = vmatprep.subr.bf16.mxu0 0
          %949 = vmatpush1.bf16.msra.mxu0 0
          %950 = vmatprep.subr.bf16.mxu0 0
          %951 = vmatpush1.bf16.msra.mxu0 0
          %952 = vmatprep.subr.bf16.mxu0 0
          %953 = vmatpush1.bf16.msra.mxu0 0
          %954 = vmatprep.subr.bf16.mxu0 0
          %955 = vmatpush1.bf16.msra.mxu0 0
          %956 = vmatprep.subr.bf16.mxu0 0
          %957 = vmatpush1.bf16.msra.mxu0 %v940
          %958 = vmatprep.subr.bf16.mxu0 0
          %959 = vmatpush2.bf16.msra.mxu0 0
          %960 = vmatprep.subr.bf16.mxu0 0
          %961 = vmatpush2.bf16.msra.mxu0 0
          %962 = vmatprep.subr.bf16.mxu0 0
          %963 = vmatpush2.bf16.msra.mxu0 0
          %964 = vmatprep.subr.bf16.mxu0 0
          %965 = vmatpush2.bf16.msra.mxu0 0
          %966 = vmatprep.subr.bf16.mxu0 0
          %967 = vmatpush2.bf16.msra.mxu0 0
          %968 = vmatprep.subr.bf16.mxu0 0
          %969 = vmatpush2.bf16.msra.mxu0 0
          %970 = vmatprep.subr.bf16.mxu0 0
          %971 = vmatpush2.bf16.msra.mxu0 0
          %972 = vmatprep.subr.bf16.mxu0 0
          %973 = vmatpush2.bf16.msra.mxu0 0
          %974 = vmatprep.mubr.bf16.mxu0 0
          %975 = vmatmul.mubr.bf16.gmra.mxu0 %v937
          %v976 = vpop.f32.mrf.mxu0
          %v977 = vadd.f32 0.0, %v976
          %v978 = vpop.f32.mrf.mxu0
          %v979 = vpop.f32.mrf.mxu0
          %v980 = vpop.f32.mrf.mxu0
          %981 = vdwg.mxu0
          %v983 = vsel %vm579, %v887, 0
          %v986 = vsel %vm892, %v575, 0
          %988 = vmatprep.subr.bf16.mxu0 0
          %989 = vmatpush1.bf16.msra.mxu0 0
          %990 = vmatprep.subr.bf16.mxu0 0
          %991 = vmatpush1.bf16.msra.mxu0 0
          %992 = vmatprep.subr.bf16.mxu0 0
          %993 = vmatpush1.bf16.msra.mxu0 0
          %994 = vmatprep.subr.bf16.mxu0 0
          %995 = vmatpush1.bf16.msra.mxu0 0
          %996 = vmatprep.subr.bf16.mxu0 0
          %997 = vmatpush1.bf16.msra.mxu0 0
          %998 = vmatprep.subr.bf16.mxu0 0
          %999 = vmatpush1.bf16.msra.mxu0 0
          %1000 = vmatprep.subr.bf16.mxu0 0
          %1001 = vmatpush1.bf16.msra.mxu0 0
          %1002 = vmatprep.subr.bf16.mxu0 0
          %1003 = vmatpush1.bf16.msra.mxu0 %v986
          %1004 = vmatprep.subr.bf16.mxu0 0
          %1005 = vmatpush2.bf16.msra.mxu0 0
          %1006 = vmatprep.subr.bf16.mxu0 0
          %1007 = vmatpush2.bf16.msra.mxu0 0
          %1008 = vmatprep.subr.bf16.mxu0 0
          %1009 = vmatpush2.bf16.msra.mxu0 0
          %1010 = vmatprep.subr.bf16.mxu0 0
          %1011 = vmatpush2.bf16.msra.mxu0 0
          %1012 = vmatprep.subr.bf16.mxu0 0
          %1013 = vmatpush2.bf16.msra.mxu0 0
          %1014 = vmatprep.subr.bf16.mxu0 0
          %1015 = vmatpush2.bf16.msra.mxu0 0
          %1016 = vmatprep.subr.bf16.mxu0 0
          %1017 = vmatpush2.bf16.msra.mxu0 0
          %1018 = vmatprep.subr.bf16.mxu0 0
          %1019 = vmatpush2.bf16.msra.mxu0 0
          %1020 = vmatprep.mubr.bf16.mxu0 0
          %1021 = vmatmul.mubr.bf16.gmra.mxu0 %v983
          %v1022 = vpop.f32.mrf.mxu0
          %v1023 = vadd.f32 0.0, %v1022
          %v1024 = vpop.f32.mrf.mxu0
          %v1025 = vpop.f32.mrf.mxu0
          %v1026 = vpop.f32.mrf.mxu0
          %1027 = vdwg.mxu0
          %v1029 = vsel %vm579, %v888, 0
          %v1032 = vsel %vm892, %v576, 0
          %1034 = vmatprep.subr.bf16.mxu0 0
          %1035 = vmatpush1.bf16.msra.mxu0 0
          %1036 = vmatprep.subr.bf16.mxu0 0
          %1037 = vmatpush1.bf16.msra.mxu0 0
          %1038 = vmatprep.subr.bf16.mxu0 0
          %1039 = vmatpush1.bf16.msra.mxu0 0
          %1040 = vmatprep.subr.bf16.mxu0 0
          %1041 = vmatpush1.bf16.msra.mxu0 0
          %1042 = vmatprep.subr.bf16.mxu0 0
          %1043 = vmatpush1.bf16.msra.mxu0 0
          %1044 = vmatprep.subr.bf16.mxu0 0
          %1045 = vmatpush1.bf16.msra.mxu0 0
          %1046 = vmatprep.subr.bf16.mxu0 0
          %1047 = vmatpush1.bf16.msra.mxu0 0
          %1048 = vmatprep.subr.bf16.mxu0 0
          %1049 = vmatpush1.bf16.msra.mxu0 %v1032
          %1050 = vmatprep.subr.bf16.mxu0 0
          %1051 = vmatpush2.bf16.msra.mxu0 0
          %1052 = vmatprep.subr.bf16.mxu0 0
          %1053 = vmatpush2.bf16.msra.mxu0 0
          %1054 = vmatprep.subr.bf16.mxu0 0
          %1055 = vmatpush2.bf16.msra.mxu0 0
          %1056 = vmatprep.subr.bf16.mxu0 0
          %1057 = vmatpush2.bf16.msra.mxu0 0
          %1058 = vmatprep.subr.bf16.mxu0 0
          %1059 = vmatpush2.bf16.msra.mxu0 0
          %1060 = vmatprep.subr.bf16.mxu0 0
          %1061 = vmatpush2.bf16.msra.mxu0 0
          %1062 = vmatprep.subr.bf16.mxu0 0
          %1063 = vmatpush2.bf16.msra.mxu0 0
          %1064 = vmatprep.subr.bf16.mxu0 0
          %1065 = vmatpush2.bf16.msra.mxu0 0
          %1066 = vmatprep.mubr.bf16.mxu0 0
          %1067 = vmatmul.mubr.bf16.gmra.mxu0 %v1029
          %v1068 = vpop.f32.mrf.mxu0
          %v1069 = vadd.f32 0.0, %v1068
          %v1070 = vpop.f32.mrf.mxu0
          %v1071 = vpop.f32.mrf.mxu0
          %v1072 = vpop.f32.mrf.mxu0
          %1073 = vdwg.mxu0
          %v1074 = vadd.f32 %v881, %v931
          %v1075 = vadd.f32 %v882, %v977
          %v1076 = vadd.f32 %v883, %v1023
          %v1077 = vadd.f32 %v884, %v1069
          %1078 = vst.msk [vmem:[#allocation4] sm:$0xff] %vm579, %v1074
          %1079 = vst.msk [vmem:[#allocation4 + $0x8] sm:$0xff] %vm579, %v1075
          %1080 = vst.msk [vmem:[#allocation4 + $0x10] sm:$0xff] %vm579, %v1076
          %1081 = vst.msk [vmem:[#allocation4 + $0x18] sm:$0xff] %vm579, %v1077
          %1082 = vst.msk [vmem:[#allocation2] sm:$0xff] %vm852, %v780
          %1083 = vst.msk [vmem:[#allocation2 + $0x8] sm:$0xff] %vm852, %v781
          %1084 = vst.msk [vmem:[#allocation2 + $0x10] sm:$0xff] %vm852, %v782
          %1085 = vst.msk [vmem:[#allocation2 + $0x18] sm:$0xff] %vm852, %v783
        $region175: #{mha_forward.3} parent=154 // pred_fallthru
          _
        // Predicated region
        $region176: #{mha_forward.3} parent=154 // pred_check
          %p1086 = pneg %p534
        $region177: #{mha_forward.3} parent=154 // pred_check_branch
          %1088 = sbr.rel (%p1086) target = $region179
        $region178: #{mha_forward.3} parent=154 // pred_region
          %v1089 = vld [vmem:[#allocation3] sm:$0xff]
          %v1090 = vld [vmem:[#allocation3 + $0x8] sm:$0xff]
          %v1091 = vld [vmem:[#allocation3 + $0x10] sm:$0xff]
          %v1092 = vld [vmem:[#allocation3 + $0x18] sm:$0xff]
          %vm1093 = vcmp.gt.f32.partialorder %v1089, 0.0
          %vm1094 = vcmp.gt.f32.partialorder %v1090, 0.0
          %vm1095 = vcmp.gt.f32.partialorder %v1091, 0.0
          %vm1096 = vcmp.gt.f32.partialorder %v1092, 0.0
          %v1097 = vsel %vm1093, %v1089, 1.0
          %v1098 = vsel %vm1094, %v1090, 1.0
          %v1099 = vsel %vm1095, %v1091, 1.0
          %v1100 = vsel %vm1096, %v1092, 1.0
          %v1101 = vrcp.pop %v1097
          %v1102 = vrcp.pop %v1098
          %v1103 = vrcp.pop %v1099
          %v1104 = vrcp.pop %v1100
          %v1105 = vld [vmem:[#allocation4] sm:$0xff]
          %1107 = vset.pattern.permute.xlu0 0
          %1108 = vperm.xlu0 %1107, %v1101
          %v1109 = vpop.permute.xlu0 %1108
          %v1111 = vmul.f32 %v1105, %v1109
          %v1112 = vpack.c.bf16 %v1111, %v1111
          %vm1113 = vcmask 60416
          %1114 = vst.msk [vmem:[#allocation5] sm:$0xf] %vm1113, %v1112
          %s1115 = scalar_lea.vmem [#allocation4], 8
          %v1116 = vld [vmem:[%s1115] sm:$0xff]
          %1118 = vset.pattern.permute.xlu0 0
          %1119 = vperm.xlu0 %1118, %v1102
          %v1120 = vpop.permute.xlu0 %1119
          %v1122 = vmul.f32 %v1116, %v1120
          %v1123 = vpack.c.bf16 %v1122, %v1122
          %v1125 = vunpack.c.l.b16 %v1123
          %v1126 = vpack.c.b16 %v1125, %v1125
          %1127 = vrot.lane.b32.xlu0 %v1126, 8
          %v1128 = vpop.permute.xlu0 %1127
          %vm1130 = vcmask 126016
          %1131 = vst.msk [vmem:[#allocation5] sm:$0xf] %vm1130, %v1128
          %s1132 = scalar_lea.vmem [#allocation4], 16
          %v1133 = vld [vmem:[%s1132] sm:$0xff]
          %1135 = vset.pattern.permute.xlu0 0
          %1136 = vperm.xlu0 %1135, %v1103
          %v1137 = vpop.permute.xlu0 %1136
          %v1139 = vmul.f32 %v1133, %v1137
          %v1140 = vpack.c.bf16 %v1139, %v1139
          %v1142 = vunpack.c.l.b16 %v1140
          %v1143 = vpack.c.b16 %v1142, %v1142
          %1144 = vrot.lane.b32.xlu0 %v1143, 16
          %v1145 = vpop.permute.xlu0 %1144
          %vm1147 = vcmask 191616
          %1148 = vst.msk [vmem:[#allocation5] sm:$0xf] %vm1147, %v1145
          %s1149 = scalar_lea.vmem [#allocation4], 24
          %v1150 = vld [vmem:[%s1149] sm:$0xff]
          %1152 = vset.pattern.permute.xlu0 0
          %1153 = vperm.xlu0 %1152, %v1104
          %v1154 = vpop.permute.xlu0 %1153
          %v1156 = vmul.f32 %v1150, %v1154
          %v1157 = vpack.c.bf16 %v1156, %v1156
          %v1159 = vunpack.c.l.b16 %v1157
          %v1160 = vpack.c.b16 %v1159, %v1159
          %1161 = vrot.lane.b32.xlu0 %v1160, 24
          %v1162 = vpop.permute.xlu0 %1161
          %vm1164 = vcmask 257216
          %1165 = vst.msk [vmem:[#allocation5] sm:$0xf] %vm1164, %v1162
          %v1166 = vld [vmem:[#allocation5] sm:$0xf]
          %v1167 = vld [vmem:[%s5] sm:$0xf]
          %v1168 = vld [vmem:[%s5 + $0x4] sm:$0xf]
          %v1169 = vld [vmem:[%s5 + $0x8] sm:$0xf]
          %v1170 = vld [vmem:[%s5 + $0xc] sm:$0xf]
          %v1171 = vld [vmem:[%s6] sm:$0x1]
          %v1173 = vlaneseq
          %v1174 = vshrl.u32 %v1173, 7
          %v1175 = vsub.s32 0, %v1174
          %v1176 = vrot.slane %v1171, %v1175
          %v1182 = vunpack.c.l.b16 %v1167
          %v1183 = vunpack.c.l.b16 %v1168
          %v1184 = vunpack.c.l.b16 %v1169
          %v1185 = vunpack.c.l.b16 %v1170
          %v1186 = vpack.c.b16 %v1183, %v1182
          %v1187 = vpack.c.b16 %v1185, %v1184
          %vm1190 = vcmask 261120
          %v1192 = vsel %vm1190, %v1166, 0
          %1194 = vmatprep.subr.bf16.mxu0 0
          %1195 = vmatpush1.bf16.msra.mxu0 0
          %1196 = vmatprep.subr.bf16.mxu0 0
          %1197 = vmatpush1.bf16.msra.mxu0 0
          %1198 = vmatprep.subr.bf16.mxu0 0
          %1199 = vmatpush1.bf16.msra.mxu0 0
          %1200 = vmatprep.subr.bf16.mxu0 0
          %1201 = vmatpush1.bf16.msra.mxu0 0
          %1202 = vmatprep.subr.bf16.mxu0 0
          %1203 = vmatpush1.bf16.msra.mxu0 0
          %1204 = vmatprep.subr.bf16.mxu0 0
          %1205 = vmatpush1.bf16.msra.mxu0 0
          %1206 = vmatprep.subr.bf16.mxu0 0
          %1207 = vmatpush1.bf16.msra.mxu0 %v1187
          %1208 = vmatprep.subr.bf16.mxu0 0
          %1209 = vmatpush1.bf16.msra.mxu0 %v1186
          %1210 = vmatprep.subr.bf16.mxu0 0
          %1211 = vmatpush2.bf16.msra.mxu0 0
          %1212 = vmatprep.subr.bf16.mxu0 0
          %1213 = vmatpush2.bf16.msra.mxu0 0
          %1214 = vmatprep.subr.bf16.mxu0 0
          %1215 = vmatpush2.bf16.msra.mxu0 0
          %1216 = vmatprep.subr.bf16.mxu0 0
          %1217 = vmatpush2.bf16.msra.mxu0 0
          %1218 = vmatprep.subr.bf16.mxu0 0
          %1219 = vmatpush2.bf16.msra.mxu0 0
          %1220 = vmatprep.subr.bf16.mxu0 0
          %1221 = vmatpush2.bf16.msra.mxu0 0
          %1222 = vmatprep.subr.bf16.mxu0 0
          %1223 = vmatpush2.bf16.msra.mxu0 0
          %1224 = vmatprep.subr.bf16.mxu0 0
          %1225 = vmatpush2.bf16.msra.mxu0 0
          %1226 = vmatprep.mubr.bf16.mxu0 0
          %1227 = vmatmul.mubr.bf16.gmra.mxu0 %v1192
          %v1228 = vpop.f32.mrf.mxu0
          %v1229 = vadd.f32 %v1176, %v1228
          %v1230 = vpop.f32.mrf.mxu0
          %v1231 = vpop.f32.mrf.mxu0
          %v1232 = vpop.f32.mrf.mxu0
          %1233 = vdwg.mxu0
          %1234 = vst.msk [vmem:[%s522] sm:$0xff] %vm1190, %v1229
        $region179: #{mha_forward.3} parent=154 // pred_fallthru
          _
        %s1235 = sand.u32 %s212, 1
        %s1236 = scalar_lea.sflag [#allocation12], %s1235
        %s1237 = sand.u32 %s212, 1
        %s1238 = smul.addr %s1237, 8
        %s1239 = scalar_lea.vmem [#allocation11], %s1238
        // Predicated region
        $region180: #{mha_forward.3} parent=154 // pred_check
          %p1240 = pneg %p222
        $region181: #{mha_forward.3} parent=154 // pred_check_branch
          %1242 = sbr.rel (%p1240) target = $region183
        $region182: #{mha_forward.3} parent=154 // pred_region
          %s1244 = ssub.s32 128, 128
          %1245 = vsyncadd %s1236, %s1244
          %s1246 = sadd.s32 %s33, %s32
          %s1247 = smul.addr %s1246, 128
          %s1248 = scalar_lea.hbm %s7, %s1247
          %s1250 = sshll.u32 %s1239, 4
          %s1251 = int_to_ptr.vmem [resolvable:$true] %s1250
          %1253 = dma.vmem_to_hbm [thread:$0]  %s1251, 128, %s1248, %s1236
        $region183: #{mha_forward.3} parent=154 // pred_fallthru
          _
      $region155: #{mha_forward.3} parent=5 // pred_fallthru
        _
      %p1254 = scmp.le.s32.totalorder 2, %s22
      // Predicated region
      $region184: #{mha_forward.3} parent=5 // pred_check
        %p1255 = pneg %p1254
      $region185: #{mha_forward.3} parent=5 // pred_check_branch
        %1257 = sbr.rel (%p1255) target = $region187
      $region186: #{mha_forward.3} parent=5 // pred_region
        %s1258 = ssub.s32 %s22, 2
        // Predicated region
        $region188: #{mha_forward.3} parent=186 // pred_check
          %p1259 = pneg %p228
        $region189: #{mha_forward.3} parent=186 // pred_check_branch
          %1261 = sbr.rel (%p1259) target = $region191
        $region190: #{mha_forward.3} parent=186 // pred_region
          %s1262 = sand.u32 %s213, 1
          %s1263 = scalar_lea.sflag [#allocation12], %s1262
          %s1264 = sand.u32 %s213, 1
          %s1265 = smul.addr %s1264, 8
          %s1266 = scalar_lea.vmem [#allocation11], %s1265
          %1267 = dma.done %s1263, 128
        $region191: #{mha_forward.3} parent=186 // pred_fallthru
          _
      $region187: #{mha_forward.3} parent=5 // pred_fallthru
        _
    $region6: #{mha_forward.3} parent=1 // loop_footer
      %s26 = sadd.s32 1, %s22
    $region7: #{mha_forward.3} parent=1 // loop_footer_branch
      %21 = sbr.rel target = $region3
    $region8: #{mha_forward.3} parent=1 // loop_exit
      _
    %1268 = vsyncpa [#allocation12], 1
    %s1269 = scalar_lea.sflag [#allocation12], 1
    %1270 = vsyncpa %s1269, 1

</llo_original>
